<compile_context>
chip_gen: v7x
topology: tpu7x:2x2x1
jax: 0.10.0
libtpu: 0.0.40
codegen_flags: <defaults>
</compile_context>

<pallas_src>
import functools

import numpy as np

import jax
import jax.numpy as jnp
from jax.experimental import pallas as pl
from jax.experimental.pallas import tpu as pltpu


def _round_up(x, m):
    return ((x + m - 1) // m) * m


def _feature_sample_kernel(band_ref, idx_ref, w_ref, data_ref, out_ref,
                           acc_ref, *, compute_dtype):
    """Grid = (N-tiles, band-K); one call handles one (TILE_N, TILE_M) slab.

    band_ref: (grid_n,) int32 SMEM  first table-row *block* touched by tile i
    idx_ref : (TN, 4) int32         flat corner row ids [i00, i01, i10, i11]
    w_ref   : (TN, 4) float32       matching bilinear corner weights
    data_ref: (TM, F) float32       slab of the flattened feature table
    out_ref : (TN, F) float32       sampled features, module layout
    acc_ref : (TN, F) float32       accumulator across the band (K) axis
    """
    i = pl.program_id(0)
    k = pl.program_id(1)
    tm = data_ref.shape[0]

    @pl.when(k == 0)
    def _():
        acc_ref[...] = jnp.zeros_like(acc_ref)

    # Global table-row id of each lane of this band slab: slim (1, TM) iota,
    # broadcast against the (TN, 1) corner-index columns below.
    base = (band_ref[i] + k) * tm
    rows = jax.lax.broadcasted_iota(jnp.int32, (1, tm), 1) + base

    # sel[n, m] = sum of corner weights of pixel n whose flat row id == m.
    # Additive construction keeps clamped-edge duplicates correct
    # (coincident corners simply sum their weights).
    sel = jnp.where(rows == idx_ref[:, 0:1], w_ref[:, 0:1], 0.0)
    sel = sel + jnp.where(rows == idx_ref[:, 1:2], w_ref[:, 1:2], 0.0)
    sel = sel + jnp.where(rows == idx_ref[:, 2:3], w_ref[:, 2:3], 0.0)
    sel = sel + jnp.where(rows == idx_ref[:, 3:4], w_ref[:, 3:4], 0.0)

    rhs = data_ref[...]
    if compute_dtype != jnp.float32:
        sel = sel.astype(compute_dtype)
        rhs = rhs.astype(compute_dtype)

    acc_ref[...] += jnp.dot(sel, rhs,
                            preferred_element_type=jnp.float32,
                            precision=jax.lax.Precision.HIGHEST)

    @pl.when(k == pl.num_programs(1) - 1)
    def _():
        out_ref[...] = acc_ref[...].astype(out_ref.dtype)


def _vmem_capacity_bytes():
    try:
        return int(pltpu.get_tpu_info().vmem_capacity_bytes)
    except Exception:
        return 64 * 1024 * 1024     # conservative fallback (v7x per-TC VMEM)


@functools.partial(
    jax.jit,
    static_argnames=("n", "tile_n", "tile_m", "num_k", "compute_dtype"))
def feature_sample(idx_pad, w_pad, data_pad, band, *, n, tile_n, tile_m,
                   num_k, compute_dtype=jnp.float32):
    """Sample features for all n pixels. Returns (n, F) float32."""
    n_pad = idx_pad.shape[0]
    m_pad, f = data_pad.shape
    grid = (n_pad // tile_n, num_k)

    # Scoped-VMEM budget: double-buffered blocks + accumulator + slack,
    # capped at the physical per-core VMEM of the chip we compile for.
    lp = lambda c: _round_up(c, 128)          # minor-dim lane padding
    need = (2 * tile_n * lp(4) * 4            # idx block (int32)
            + 2 * tile_n * lp(4) * 4          # weight block
            + 2 * tile_m * lp(f) * 4          # table slab
            + 2 * tile_n * lp(f) * 4          # output block
            + tile_n * lp(f) * 4              # accumulator scratch
            + (2 << 20))                      # slack
    cap = _vmem_capacity_bytes()
    vmem_limit = int(min(cap, max(need, min(3 * cap // 4, 96 << 20))))

    kernel = functools.partial(_feature_sample_kernel,
                               compute_dtype=compute_dtype)

    out = pl.pallas_call(
        kernel,
        out_shape=jax.ShapeDtypeStruct((n_pad, f), jnp.float32),
        grid_spec=pltpu.PrefetchScalarGridSpec(
            num_scalar_prefetch=1,
            grid=grid,
            in_specs=[
                pl.BlockSpec((tile_n, 4), lambda i, k, b: (i, 0)),
                pl.BlockSpec((tile_n, 4), lambda i, k, b: (i, 0)),
                # Data-dependent band offset: only the table blocks this pixel
                # tile actually touches are streamed.  (The Pallas pipeline
                # skips the re-fetch when band[i]+k repeats across steps, so a
                # small table is effectively VMEM-resident for free.)
                pl.BlockSpec((tile_m, f), lambda i, k, b: (b[i] + k, 0)),
            ],
            out_specs=pl.BlockSpec((tile_n, f), lambda i, k, b: (i, 0)),
            scratch_shapes=[pltpu.VMEM((tile_n, f), jnp.float32)],
        ),
        compiler_params=pltpu.CompilerParams(
            dimension_semantics=("parallel", "arbitrary"),
            vmem_limit_bytes=vmem_limit),
    )(band, idx_pad, w_pad, data_pad)

    return out[:n]


def prepare_feature_sampling(idx_nt, w_nt, data2d, *, tile_n=2048, tile_m=1024):
    """One-time host-side prep (module-construction time, never re-run per call).

    Pads N (edge-replicated indices, zero weights) and M (zero rows) to the
    tile sizes, and computes the per-N-tile band of table-row blocks actually
    touched (scalar-prefetch operand) plus the static band depth num_k.
    """
    idx_np = np.asarray(idx_nt, dtype=np.int32)
    w_np = np.asarray(w_nt, dtype=np.float32)
    data_np = np.asarray(data2d, dtype=np.float32)

    n = idx_np.shape[0]
    m, f = data_np.shape

    # Lane-aligned tiles, clamped to the problem size; keep >= 2 steps on the
    # parallel N axis when possible so both v7x TensorCores are used.
    tile_n = min(tile_n, _round_up(n, 128))
    tile_m = min(tile_m, _round_up(m, 128))
    n_pad_min = _round_up(n, 128)
    if n_pad_min // tile_n < 2:
        half = (n_pad_min // 2 // 128) * 128
        if half >= 128:
            tile_n = min(tile_n, half)

    n_pad = _round_up(n, tile_n)
    m_pad = _round_up(m, tile_m)

    # Padded pixels replicate the last real pixel's corner ids (keeps the band
    # tight) with zero weights (exact-zero rows, sliced off after the kernel).
    if n_pad > n:
        idx_np = np.concatenate(
            [idx_np, np.repeat(idx_np[-1:], n_pad - n, axis=0)], axis=0)
        w_np = np.concatenate(
            [w_np, np.zeros((n_pad - n, 4), np.float32)], axis=0)
    if m_pad > m:
        data_np = np.concatenate(
            [data_np, np.zeros((m_pad - m, f), np.float32)], axis=0)

    # Band of table-row blocks touched by each pixel tile.
    grid_n = n_pad // tile_n
    tiles = idx_np.reshape(grid_n, tile_n * 4)
    lo = tiles.min(axis=1) // tile_m
    hi = tiles.max(axis=1) // tile_m
    num_k = int((hi - lo).max()) + 1
    num_m_blocks = m_pad // tile_m
    band = np.minimum(lo, num_m_blocks - num_k).astype(np.int32)

    return dict(idx=jnp.asarray(idx_np), w=jnp.asarray(w_np),
                data=jnp.asarray(data_np), band=jnp.asarray(band),
                n=n, tile_n=int(tile_n), tile_m=int(tile_m), num_k=int(num_k))


def make_g_feature_tensor(x_dim, y_dim, num_feats=32, ds_factor=1, seed=0):
    """Deterministic JAX replica of G_FeatureTensor.__init__'s buffers."""
    x_mode, y_mode = x_dim // ds_factor, y_dim // ds_factor

    key = jax.random.PRNGKey(seed)
    data = 0.0002 * jax.random.uniform(
        key, (x_mode, y_mode, num_feats), dtype=jnp.float32) - 0.0001

    half_dx, half_dy = 0.5 / x_dim, 0.5 / y_dim
    xs_lin = jnp.linspace(half_dx, 1.0 - half_dx, x_dim, dtype=jnp.float32)
    # NOTE: original module uses half_dx (not half_dy) for the start of ys.
    ys_lin = jnp.linspace(half_dx, 1.0 - half_dy, y_dim, dtype=jnp.float32)

    xv, yv = jnp.meshgrid(xs_lin, ys_lin, indexing="ij")      # (x_dim, y_dim)
    xy = jnp.stack((yv.flatten(), xv.flatten()), axis=0).T    # (N, 2)
    scaled = xy * jnp.array([x_mode, y_mode], dtype=jnp.float32)

    indices = scaled.astype(jnp.int32)                        # trunc == floor (>=0)
    lerp = scaled - indices.astype(jnp.float32)               # (N, 2)

    x0 = jnp.clip(indices[:, 0], 0, x_mode - 1)
    y0 = jnp.clip(indices[:, 1], 0, y_mode - 1)
    x1 = jnp.clip(x0 + 1, None, x_mode - 1)
    y1 = jnp.clip(y0 + 1, None, y_mode - 1)

    # data[a, b] on an (x_mode, y_mode, F) tensor -> flat row a * y_mode + b.
    # (Replicates the original module's square-grid indexing quirk: the x*
    # indices are clamped with x_mode even though they index the y_mode axis.)
    i00 = y0 * y_mode + x0
    i01 = y0 * y_mode + x1
    i10 = y1 * y_mode + x0
    i11 = y1 * y_mode + x1
    idx_nt = jnp.stack([i00, i01, i10, i11], axis=1).astype(jnp.int32)   # (N, 4)

    wx, wy = lerp[:, 0], lerp[:, 1]
    w_nt = jnp.stack([(1.0 - wx) * (1.0 - wy),
                      wx * (1.0 - wy),
                      (1.0 - wx) * wy,
                      wx * wy], axis=1).astype(jnp.float32)              # (N, 4)

    data2d = data.reshape(x_mode * y_mode, num_feats)                    # (M, F)
    buffers = dict(x0=x0, y0=y0, x1=x1, y1=y1, lerp=lerp)
    return data, data2d, idx_nt, w_nt, buffers


def reference_sample(data, buffers):
    """Direct transcription of G_FeatureTensor.sample() in pure JAX."""
    x0, y0, x1, y1, lw = (buffers["x0"], buffers["y0"], buffers["x1"],
                          buffers["y1"], buffers["lerp"])
    wx, wy = lw[:, 0:1], lw[:, 1:2]
    return (data[y0, x0] * (1.0 - wx) * (1.0 - wy)
            + data[y0, x1] * wx * (1.0 - wy)
            + data[y1, x0] * (1.0 - wx) * wy
            + data[y1, x1] * wx * wy)


if __name__ == "__main__":
    # Small but representative: 16x16 grid, 32 features -> output (256, 32).
    x_dim, y_dim, num_feats = 16, 16, 32
    data, data2d, idx_nt, w_nt, buffers = make_g_feature_tensor(
        x_dim, y_dim, num_feats)

    # One-time prep (padding + per-tile band analysis); tiles get clamped to
    # 128 / 256 here, and the whole (256, 32) table fits in a single band
    # block so num_k == 1 and the table is fetched exactly once.
    plan = prepare_feature_sampling(idx_nt, w_nt, data2d)

    out = feature_sample(plan["idx"], plan["w"], plan["data"], plan["band"],
                         n=plan["n"], tile_n=plan["tile_n"],
                         tile_m=plan["tile_m"], num_k=plan["num_k"])
    out = jax.block_until_ready(out)

    ref = reference_sample(data, buffers)
    n = x_dim * y_dim
    assert out.shape == (n, num_feats), out.shape
    assert jnp.allclose(out, ref, rtol=1e-5, atol=1e-6), "mismatch vs reference"

    print("KERNEL_OK")
</pallas_src>

<mosaic_0001>
module attributes {stable_mosaic.version = 11 : i64} {
  func.func @_feature_sample_kernel(%arg0: i32, %arg1: i32, %arg2: memref<2xi32, #tpu.memory_space<smem>>, %arg3: memref<128x4xi32, #tpu.memory_space<vmem>>, %arg4: memref<128x4xf32, #tpu.memory_space<vmem>>, %arg5: memref<256x32xf32, #tpu.memory_space<vmem>>, %arg6: memref<128x32xf32, #tpu.memory_space<vmem>>, %arg7: memref<128x32xf32, #tpu.memory_space<vmem>>) attributes {dimension_semantics = [#tpu.dimension_semantics<parallel>, #tpu.dimension_semantics<arbitrary>], iteration_bounds = array<i64: 2, 1>, scalar_prefetch = 1 : i64, scratch_operands = 1 : i64, tpu.core_type = #tpu.core_type<tc>, window_params = [{transform_indices = @transform_0, window_bounds = array<i64: 128, 4>}, {transform_indices = @transform_1, window_bounds = array<i64: 128, 4>}, {transform_indices = @transform_2, window_bounds = array<i64: 256, 32>}, {transform_indices = @transform_3, window_bounds = array<i64: 128, 32>}]} {
    %c0_i32 = arith.constant 0 : i32
    %0 = arith.cmpi eq, %arg1, %c0_i32 : i32
    %1 = arith.extui %0 : i1 to i32
    %c0_i32_0 = arith.constant 0 : i32
    %2 = arith.cmpi ne, %1, %c0_i32_0 : i32
    scf.if %2 {
      %cst_25 = arith.constant 0.000000e+00 : f32
      %57 = vector.broadcast %cst_25 : f32 to vector<128x32xf32>
      %c0_26 = arith.constant 0 : index
      %c0_27 = arith.constant 0 : index
      %58 = vector.load %arg7[%c0_26, %c0_27] : memref<128x32xf32, #tpu.memory_space<vmem>>, vector<128x32xf32>
      tpu.vector_store %arg7[%c0_26, %c0_27], %57 {strides = array<i32>} : memref<128x32xf32, #tpu.memory_space<vmem>>, vector<128x32xf32>,
    } else {
    }
    %3 = arith.index_cast %arg0 : i32 to index
    %4 = memref.load %arg2[%3] : memref<2xi32, #tpu.memory_space<smem>>
    %5 = arith.addi %4, %arg1 : i32
    %c256_i32 = arith.constant 256 : i32
    %6 = arith.muli %5, %c256_i32 : i32
    %7 = tpu.iota {dimensions = array<i32: 1>} : vector<1x256xi32>
    %8 = vector.broadcast %6 : i32 to vector<1x256xi32>
    %9 = arith.addi %7, %8 : vector<1x256xi32>
    %c0 = arith.constant 0 : index
    %c0_1 = arith.constant 0 : index
    %10 = vector.load %arg3[%c0, %c0_1] : memref<128x4xi32, #tpu.memory_space<vmem>>, vector<128x1xi32>
    %11 = vector.broadcast %9 : vector<1x256xi32> to vector<128x256xi32>
    %12 = vector.broadcast %10 : vector<128x1xi32> to vector<128x256xi32>
    %13 = arith.cmpi eq, %11, %12 : vector<128x256xi32>
    %c0_2 = arith.constant 0 : index
    %c0_3 = arith.constant 0 : index
    %14 = vector.load %arg4[%c0_2, %c0_3] : memref<128x4xf32, #tpu.memory_space<vmem>>, vector<128x1xf32>
    %cst = arith.constant 0.000000e+00 : f32
    %15 = vector.shape_cast %14 : vector<128x1xf32> to vector<128x1xf32>
    %16 = vector.broadcast %15 : vector<128x1xf32> to vector<128x256xf32>
    %17 = vector.broadcast %cst : f32 to vector<128x256xf32>
    %18 = arith.select %13, %16, %17 : vector<128x256xi1>, vector<128x256xf32>
    %c0_4 = arith.constant 0 : index
    %c1 = arith.constant 1 : index
    %19 = vector.load %arg3[%c0_4, %c1] : memref<128x4xi32, #tpu.memory_space<vmem>>, vector<128x1xi32>
    %20 = vector.broadcast %9 : vector<1x256xi32> to vector<128x256xi32>
    %21 = vector.broadcast %19 : vector<128x1xi32> to vector<128x256xi32>
    %22 = arith.cmpi eq, %20, %21 : vector<128x256xi32>
    %c0_5 = arith.constant 0 : index
    %c1_6 = arith.constant 1 : index
    %23 = vector.load %arg4[%c0_5, %c1_6] : memref<128x4xf32, #tpu.memory_space<vmem>>, vector<128x1xf32>
    %cst_7 = arith.constant 0.000000e+00 : f32
    %24 = vector.shape_cast %23 : vector<128x1xf32> to vector<128x1xf32>
    %25 = vector.broadcast %24 : vector<128x1xf32> to vector<128x256xf32>
    %26 = vector.broadcast %cst_7 : f32 to vector<128x256xf32>
    %27 = arith.select %22, %25, %26 : vector<128x256xi1>, vector<128x256xf32>
    %28 = arith.addf %18, %27 : vector<128x256xf32>
    %c0_8 = arith.constant 0 : index
    %c2 = arith.constant 2 : index
    %29 = vector.load %arg3[%c0_8, %c2] : memref<128x4xi32, #tpu.memory_space<vmem>>, vector<128x1xi32>
    %30 = vector.broadcast %9 : vector<1x256xi32> to vector<128x256xi32>
    %31 = vector.broadcast %29 : vector<128x1xi32> to vector<128x256xi32>
    %32 = arith.cmpi eq, %30, %31 : vector<128x256xi32>
    %c0_9 = arith.constant 0 : index
    %c2_10 = arith.constant 2 : index
    %33 = vector.load %arg4[%c0_9, %c2_10] : memref<128x4xf32, #tpu.memory_space<vmem>>, vector<128x1xf32>
    %cst_11 = arith.constant 0.000000e+00 : f32
    %34 = vector.shape_cast %33 : vector<128x1xf32> to vector<128x1xf32>
    %35 = vector.broadcast %34 : vector<128x1xf32> to vector<128x256xf32>
    %36 = vector.broadcast %cst_11 : f32 to vector<128x256xf32>
    %37 = arith.select %32, %35, %36 : vector<128x256xi1>, vector<128x256xf32>
    %38 = arith.addf %28, %37 : vector<128x256xf32>
    %c0_12 = arith.constant 0 : index
    %c3 = arith.constant 3 : index
    %39 = vector.load %arg3[%c0_12, %c3] : memref<128x4xi32, #tpu.memory_space<vmem>>, vector<128x1xi32>
    %40 = vector.broadcast %9 : vector<1x256xi32> to vector<128x256xi32>
    %41 = vector.broadcast %39 : vector<128x1xi32> to vector<128x256xi32>
    %42 = arith.cmpi eq, %40, %41 : vector<128x256xi32>
    %c0_13 = arith.constant 0 : index
    %c3_14 = arith.constant 3 : index
    %43 = vector.load %arg4[%c0_13, %c3_14] : memref<128x4xf32, #tpu.memory_space<vmem>>, vector<128x1xf32>
    %cst_15 = arith.constant 0.000000e+00 : f32
    %44 = vector.shape_cast %43 : vector<128x1xf32> to vector<128x1xf32>
    %45 = vector.broadcast %44 : vector<128x1xf32> to vector<128x256xf32>
    %46 = vector.broadcast %cst_15 : f32 to vector<128x256xf32>
    %47 = arith.select %42, %45, %46 : vector<128x256xi1>, vector<128x256xf32>
    %48 = arith.addf %38, %47 : vector<128x256xf32>
    %c0_16 = arith.constant 0 : index
    %c0_17 = arith.constant 0 : index
    %49 = vector.load %arg5[%c0_16, %c0_17] : memref<256x32xf32, #tpu.memory_space<vmem>>, vector<256x32xf32>
    %c0_18 = arith.constant 0 : index
    %c0_19 = arith.constant 0 : index
    %50 = vector.load %arg7[%c0_18, %c0_19] : memref<128x32xf32, #tpu.memory_space<vmem>>, vector<128x32xf32>
    %cst_20 = arith.constant dense<0.000000e+00> : vector<128x32xf32>
    %51 = tpu.matmul %48, %49, %cst_20 {dimension_numbers = #tpu.dot_dimension_numbers<[1], [0], [0], [1], [0, 0, 1, 1], [], []>, precision = #tpu.contract_precision<fp32>} : vector<128x256xf32>, vector<256x32xf32>, vector<128x32xf32> -> vector<128x32xf32>
    %52 = arith.addf %50, %51 : vector<128x32xf32>
    %c0_21 = arith.constant 0 : index
    %c0_22 = arith.constant 0 : index
    %53 = vector.load %arg7[%c0_21, %c0_22] : memref<128x32xf32, #tpu.memory_space<vmem>>, vector<128x32xf32>
    tpu.vector_store %arg7[%c0_21, %c0_22], %52 {strides = array<i32>} : memref<128x32xf32, #tpu.memory_space<vmem>>, vector<128x32xf32>,
    %c0_i32_23 = arith.constant 0 : i32
    %54 = arith.cmpi eq, %arg1, %c0_i32_23 : i32
    %55 = arith.extui %54 : i1 to i32
    %c0_i32_24 = arith.constant 0 : i32
    %56 = arith.cmpi ne, %55, %c0_i32_24 : i32
    scf.if %56 {
      %c0_25 = arith.constant 0 : index
      %c0_26 = arith.constant 0 : index
      %57 = vector.load %arg7[%c0_25, %c0_26] : memref<128x32xf32, #tpu.memory_space<vmem>>, vector<128x32xf32>
      %c0_27 = arith.constant 0 : index
      %c0_28 = arith.constant 0 : index
      %58 = vector.load %arg6[%c0_27, %c0_28] : memref<128x32xf32, #tpu.memory_space<vmem>>, vector<128x32xf32>
      tpu.vector_store %arg6[%c0_27, %c0_28], %57 {strides = array<i32>} : memref<128x32xf32, #tpu.memory_space<vmem>>, vector<128x32xf32>,
    } else {
    }
    return
  }
  func.func @transform_0(%arg0: i32, %arg1: i32, %arg2: memref<2xi32, #tpu.memory_space<smem>>) -> (i32, i32) {
    %c0_i32 = arith.constant 0 : i32
    %c0_i32_0 = arith.constant 0 : i32
    return %arg0, %c0_i32 : i32, i32
  }
  func.func @transform_1(%arg0: i32, %arg1: i32, %arg2: memref<2xi32, #tpu.memory_space<smem>>) -> (i32, i32) {
    %c0_i32 = arith.constant 0 : i32
    %c0_i32_0 = arith.constant 0 : i32
    return %arg0, %c0_i32 : i32, i32
  }
  func.func @transform_2(%arg0: i32, %arg1: i32, %arg2: memref<2xi32, #tpu.memory_space<smem>>) -> (i32, i32) {
    %0 = arith.index_cast %arg0 : i32 to index
    %1 = memref.load %arg2[%0] : memref<2xi32, #tpu.memory_space<smem>>
    %2 = arith.addi %1, %arg1 : i32
    %c0_i32 = arith.constant 0 : i32
    %c0_i32_0 = arith.constant 0 : i32
    return %2, %c0_i32 : i32, i32
  }
  func.func @transform_3(%arg0: i32, %arg1: i32, %arg2: memref<2xi32, #tpu.memory_space<smem>>) -> (i32, i32) {
    %c0_i32 = arith.constant 0 : i32
    %c0_i32_0 = arith.constant 0 : i32
    return %arg0, %c0_i32 : i32, i32
  }
}

</mosaic_0001>

<llo_original>
// kernel: feature_sample.1
$region0: #{feature_sample.1}
  #allocation0 [shape = 'u32[]', space=smem, size = 0x4, offset = 0x4, fixed_abs, tag = 'smem constant byte address 0x4 - core index']
  #allocation1 [shape = 'u32[144,128]{1,0:T(1,128)}', space=vmem, size = 0x12000, scoped, tag = 'internal scratch']
  #allocation2 [shape = 'f32[128,32]{1,0:T(8,128)}', space=vmem, size = 0x10000, scoped, tag = 'scratch operand']
  #allocation3 [shape = 's32[1]{0}', space=sflag, size = 0x4, scoped, tag = 'scoped memory for feature_sample.1']
  #allocation4 [shape = 'u8[512]{0}', space=smem, size = 0x200, scoped, tag = 'prefetched SMEM operand 0']
  %s0 = inlined_call_operand.vmem [shape: s32[2], index: 0, kind: input, shape index: {}]
  %s1 = inlined_call_operand.vmem [shape: s32[256,4], index: 1, kind: input, shape index: {}]
  %s2 = inlined_call_operand.vmem [shape: f32[256,4], index: 2, kind: input, shape index: {}]
  %s3 = inlined_call_operand.vmem [shape: f32[256,32], index: 3, kind: input, shape index: {}]
  %s4 = inlined_call_operand.vmem [shape: f32[256,32], index: 4, kind: output, shape index: {}]
  %s5 = sld [smem:[#allocation0]]
  $region53: #{feature_sample.1} parent=0
    _
  %s7 = ssub.s32 1, %s5
  %s8 = scalar_select 0, %s7, %s5
  %s9 = sshll.u32 %s0, 4
  %s10 = int_to_ptr.vmem [resolvable:$true] %s9
  %12 = dma.vmem_to_smem %s10, 16, [#allocation4], [#allocation3]
  %13 = dma.done [#allocation3], 16
  %14 = sfence
  loop: start=0, step=1, limit=4
  $region2: #{feature_sample.1} parent=0 // loop_pre_header
    _
  $region3: #{feature_sample.1} parent=0 // loop_header
    %s16 = sphi 0, %s20
    %p17 = scmp.ge.s32.totalorder %s16, 4
    %s23 = sphi 0, %s35
    %s24 = sphi 0, %s31
    %s25 = sphi 0, %s23
    %s26 = sphi 0, %s24
    %s27 = sphi 0, %s25
    %s28 = sphi 0, %s26
    %s38 = sphi 0, %s40
    %s41 = sphi 0, %s38
    %s42 = sphi 0, %s41
    %s58 = sphi 0, %s42
    %s64 = sphi 0, %s66
    %s67 = sphi 0, %s64
    %s68 = sphi 0, %s67
    %s84 = sphi 0, %s68
    %s94 = sphi 0, %s96
    %s97 = sphi 0, %s94
    %s98 = sphi 0, %s97
    %s114 = sphi 0, %s98
    %s120 = sphi 0, %s122
    %s123 = sphi 0, %s120
    %s124 = sphi 0, %s123
    %s140 = sphi 0, %s124
  $region4: #{feature_sample.1} parent=0 // loop_header_branch
    %19 = sbr.rel (%p17) target = $region8
  $region5: #{feature_sample.1} parent=0 // loop_body
    %s21 = ssub.s32 %s16, 1
    %s22 = ssub.s32 %s16, 2
    %s29 = sadd.s32 1, %s24
    %p30 = scmp.ge.s32.totalorder %s29, 1
    %s31 = scalar_select %p30, 0, %s29
    %s32 = sadd.s32 1, %s23
    %s33 = scalar_select %p30, %s32, %s23
    %p34 = scmp.ge.s32.totalorder %s33, 2
    %s35 = scalar_select %p34, 0, %s33
    %s36 = ssub.s32 %s23, %s35
    %p37 = scmp.eq.s32.totalorder %s36, 0
    %s39 = sadd.s32 %s38, 1
    %s40 = scalar_select %p37, %s38, %s39
    %p43 = pneg %p37
    %p44 = scmp.eq.s32.totalorder %s16, 1
    %p45 = por %p43, %p44
    %p46 = scmp.ne.s32.totalorder %s38, %s41
    %p47 = scmp.eq.s32.totalorder %s16, 0
    %p48 = por %p46, %p47
    %p49 = scmp.ne.s32.totalorder %s38, %s41
    %p50 = scmp.eq.s32.totalorder %s21, 1
    %p51 = por %p49, %p50
    %p52 = scmp.ne.s32.totalorder %s41, %s42
    %p53 = scmp.eq.s32.totalorder %s21, 0
    %p54 = por %p52, %p53
    %p55 = scmp.ne.s32.totalorder %s41, %s42
    %p56 = scmp.eq.s32.totalorder %s22, 1
    %p57 = por %p55, %p56
    %p59 = scmp.ne.s32.totalorder %s42, %s58
    %p60 = scmp.eq.s32.totalorder %s22, 0
    %p61 = por %p59, %p60
    %s62 = ssub.s32 %s23, %s35
    %p63 = scmp.eq.s32.totalorder %s62, 0
    %s65 = sadd.s32 %s64, 1
    %s66 = scalar_select %p63, %s64, %s65
    %p69 = pneg %p63
    %p70 = scmp.eq.s32.totalorder %s16, 1
    %p71 = por %p69, %p70
    %p72 = scmp.ne.s32.totalorder %s64, %s67
    %p73 = scmp.eq.s32.totalorder %s16, 0
    %p74 = por %p72, %p73
    %p75 = scmp.ne.s32.totalorder %s64, %s67
    %p76 = scmp.eq.s32.totalorder %s21, 1
    %p77 = por %p75, %p76
    %p78 = scmp.ne.s32.totalorder %s67, %s68
    %p79 = scmp.eq.s32.totalorder %s21, 0
    %p80 = por %p78, %p79
    %p81 = scmp.ne.s32.totalorder %s67, %s68
    %p82 = scmp.eq.s32.totalorder %s22, 1
    %p83 = por %p81, %p82
    %p85 = scmp.ne.s32.totalorder %s68, %s84
    %p86 = scmp.eq.s32.totalorder %s22, 0
    %p87 = por %p85, %p86
    %s88 = sld [smem:[#allocation4 + %s23]]
    %s89 = sadd.s32 %s88, %s24
    %s90 = sld [smem:[#allocation4 + %s35]]
    %s91 = sadd.s32 %s90, %s31
    %s92 = ssub.s32 %s89, %s91
    %p93 = scmp.eq.s32.totalorder %s92, 0
    %s95 = sadd.s32 %s94, 1
    %s96 = scalar_select %p93, %s94, %s95
    %p99 = pneg %p93
    %p100 = scmp.eq.s32.totalorder %s16, 1
    %p101 = por %p99, %p100
    %p102 = scmp.ne.s32.totalorder %s94, %s97
    %p103 = scmp.eq.s32.totalorder %s16, 0
    %p104 = por %p102, %p103
    %p105 = scmp.ne.s32.totalorder %s94, %s97
    %p106 = scmp.eq.s32.totalorder %s21, 1
    %p107 = por %p105, %p106
    %p108 = scmp.ne.s32.totalorder %s97, %s98
    %p109 = scmp.eq.s32.totalorder %s21, 0
    %p110 = por %p108, %p109
    %p111 = scmp.ne.s32.totalorder %s97, %s98
    %p112 = scmp.eq.s32.totalorder %s22, 1
    %p113 = por %p111, %p112
    %p115 = scmp.ne.s32.totalorder %s98, %s114
    %p116 = scmp.eq.s32.totalorder %s22, 0
    %p117 = por %p115, %p116
    %s118 = ssub.s32 %s23, %s35
    %p119 = scmp.eq.s32.totalorder %s118, 0
    %s121 = sadd.s32 %s120, 1
    %s122 = scalar_select %p119, %s120, %s121
    %p125 = pneg %p119
    %p126 = scmp.eq.s32.totalorder %s16, 1
    %p127 = por %p125, %p126
    %p128 = scmp.ne.s32.totalorder %s120, %s123
    %p129 = scmp.eq.s32.totalorder %s16, 0
    %p130 = por %p128, %p129
    %p131 = scmp.ne.s32.totalorder %s120, %s123
    %p132 = scmp.eq.s32.totalorder %s21, 1
    %p133 = por %p131, %p132
    %p134 = scmp.ne.s32.totalorder %s123, %s124
    %p135 = scmp.eq.s32.totalorder %s21, 0
    %p136 = por %p134, %p135
    %p137 = scmp.ne.s32.totalorder %s123, %s124
    %p138 = scmp.eq.s32.totalorder %s22, 1
    %p139 = por %p137, %p138
    %p141 = scmp.ne.s32.totalorder %s124, %s140
    %p142 = scmp.eq.s32.totalorder %s22, 0
    %p143 = por %p141, %p142
    %p144 = scmp.le.s32.totalorder 1, %s16
    %p145 = scmp.lt.s32.totalorder %s16, 3
    %p146 = pnand %p144, %p145
    %p147 = pneg %p146
    // Predicated region
    $region9: #{feature_sample.1} parent=5 // pred_check
      _
    $region10: #{feature_sample.1} parent=5 // pred_check_branch
      %149 = sbr.rel (%p146) target = $region12
    $region11: #{feature_sample.1} parent=5 // pred_region
      %s150 = ssub.s32 %s16, 1
    $region12: #{feature_sample.1} parent=5 // pred_fallthru
      _
    %p151 = scmp.lt.s32.totalorder %s16, 2
    // Predicated region
    $region13: #{feature_sample.1} parent=5 // pred_check
      %p152 = pneg %p151
    $region14: #{feature_sample.1} parent=5 // pred_check_branch
      %154 = sbr.rel (%p152) target = $region16
    $region15: #{feature_sample.1} parent=5 // pred_region
      // Predicated region
      $region17: #{feature_sample.1} parent=15 // pred_check
        %p155 = pneg %p48
      $region18: #{feature_sample.1} parent=15 // pred_check_branch
        %157 = sbr.rel (%p155) target = $region20
      $region19: #{feature_sample.1} parent=15 // pred_region
        %s158 = smul.u32 16, %s23
        %p159 = scmp.lt.s32.totalorder %s158, 31
        %s160 = scalar_select %p159, %s158, 31
        %s161 = smul.addr %s160, 8
        %s162 = scalar_lea.vmem %s1, %s161
        %s163 = smul.u32 16, %s23
      $region20: #{feature_sample.1} parent=15 // pred_fallthru
        _
      // Predicated region
      $region21: #{feature_sample.1} parent=15 // pred_check
        %p164 = pneg %p74
      $region22: #{feature_sample.1} parent=15 // pred_check_branch
        %166 = sbr.rel (%p164) target = $region24
      $region23: #{feature_sample.1} parent=15 // pred_region
        %s167 = smul.u32 16, %s23
        %p168 = scmp.lt.s32.totalorder %s167, 31
        %s169 = scalar_select %p168, %s167, 31
        %s170 = smul.addr %s169, 8
        %s171 = scalar_lea.vmem %s2, %s170
        %s172 = smul.u32 16, %s23
      $region24: #{feature_sample.1} parent=15 // pred_fallthru
        _
      // Predicated region
      $region25: #{feature_sample.1} parent=15 // pred_check
        %p173 = pneg %p104
      $region26: #{feature_sample.1} parent=15 // pred_check_branch
        %175 = sbr.rel (%p173) target = $region28
      $region27: #{feature_sample.1} parent=15 // pred_region
        %s176 = sld [smem:[#allocation4 + %s23]]
        %s177 = sadd.s32 %s176, %s24
        %s178 = smul.u32 32, %s177
        %p179 = scmp.lt.s32.totalorder %s178, 31
        %s180 = scalar_select %p179, %s178, 31
        %s181 = smul.addr %s180, 8
        %s182 = scalar_lea.vmem %s3, %s181
        %s183 = sld [smem:[#allocation4 + %s23]]
        %s184 = sadd.s32 %s183, %s24
        %s185 = smul.u32 32, %s184
      $region28: #{feature_sample.1} parent=15 // pred_fallthru
        _
    $region16: #{feature_sample.1} parent=5 // pred_fallthru
      _
    %p186 = scmp.le.s32.totalorder 1, %s16
    %p187 = scmp.lt.s32.totalorder %s16, 3
    %p188 = pnand %p186, %p187
    %p189 = pneg %p188
    // Predicated region
    $region29: #{feature_sample.1} parent=5 // pred_check
      _
    $region30: #{feature_sample.1} parent=5 // pred_check_branch
      %191 = sbr.rel (%p188) target = $region32
    $region31: #{feature_sample.1} parent=5 // pred_region
      %s192 = ssub.s32 %s16, 1
      %s193 = smul.u32 16, %s25
      %p194 = scmp.lt.s32.totalorder %s193, 31
      %s195 = scalar_select %p194, %s193, 31
      %s196 = smul.addr %s195, 8
      %s197 = scalar_lea.vmem %s1, %s196
      %p198 = pneg %p54
      %p199 = pneg %p51
      %s200 = smul.u32 16, %s25
      %p201 = scmp.lt.s32.totalorder %s200, 31
      %s202 = scalar_select %p201, %s200, 31
      %s203 = smul.addr %s202, 8
      %s204 = scalar_lea.vmem %s2, %s203
      %p205 = pneg %p80
      %p206 = pneg %p77
      %s207 = sld [smem:[#allocation4 + %s25]]
      %s208 = sadd.s32 %s207, %s26
      %s209 = smul.u32 32, %s208
      %p210 = scmp.lt.s32.totalorder %s209, 31
      %s211 = scalar_select %p210, %s209, 31
      %s212 = smul.addr %s211, 8
      %s213 = scalar_lea.vmem %s3, %s212
      %p214 = pneg %p110
      %p215 = pneg %p107
      %p216 = pneg %p136
      %p217 = pneg %p133
      %s218 = smul.u32 16, %s25
      %p219 = scmp.lt.s32.totalorder %s218, 31
      %s220 = scalar_select %p219, %s218, 31
      %s221 = smul.addr %s220, 8
      %s222 = scalar_lea.vmem %s4, %s221
      %s223 = smul.u32 16, %s25
      %p224 = scmp.lt.s32.totalorder %s223, 31
      %s225 = scalar_select %p224, %s223, 31
      %s226 = smul.addr %s225, 8
      %s227 = scalar_lea.vmem %s1, %s226
      %s228 = smul.u32 16, %s25
      %s229 = smul.u32 16, %s25
      %p230 = scmp.lt.s32.totalorder %s229, 31
      %s231 = scalar_select %p230, %s229, 31
      %s232 = smul.addr %s231, 8
      %s233 = scalar_lea.vmem %s2, %s232
      %s234 = smul.u32 16, %s25
      %s235 = sld [smem:[#allocation4 + %s25]]
      %s236 = sadd.s32 %s235, %s26
      %s237 = smul.u32 32, %s236
      %p238 = scmp.lt.s32.totalorder %s237, 31
      %s239 = scalar_select %p238, %s237, 31
      %s240 = smul.addr %s239, 8
      %s241 = scalar_lea.vmem %s3, %s240
      %s242 = sld [smem:[#allocation4 + %s25]]
      %s243 = sadd.s32 %s242, %s26
      %s244 = smul.u32 32, %s243
      %s245 = smul.u32 16, %s25
      %p246 = scmp.lt.s32.totalorder %s245, 31
      %s247 = scalar_select %p246, %s245, 31
      %s248 = smul.addr %s247, 8
      %s249 = scalar_lea.vmem %s4, %s248
      %s250 = smul.u32 16, %s25
      %p251 = scmp.eq.s32.totalorder %s26, 0
      // Predicated region
      $region33: #{feature_sample.1} parent=31 // pred_check
        %p252 = pneg %p251
      $region34: #{feature_sample.1} parent=31 // pred_check_branch
        %254 = sbr.rel (%p252) target = $region36
      $region35: #{feature_sample.1} parent=31 // pred_region
        %vm255 = vcmask 261120
        %256 = vst.msk [vmem:[#allocation2] sm:$0xff] %vm255, 0.0
        %257 = vst.msk [vmem:[#allocation2 + $0x8] sm:$0xff] %vm255, 0.0
        %258 = vst.msk [vmem:[#allocation2 + $0x10] sm:$0xff] %vm255, 0.0
        %259 = vst.msk [vmem:[#allocation2 + $0x18] sm:$0xff] %vm255, 0.0
        %260 = vst.msk [vmem:[#allocation2 + $0x20] sm:$0xff] %vm255, 0.0
        %261 = vst.msk [vmem:[#allocation2 + $0x28] sm:$0xff] %vm255, 0.0
        %262 = vst.msk [vmem:[#allocation2 + $0x30] sm:$0xff] %vm255, 0.0
        %263 = vst.msk [vmem:[#allocation2 + $0x38] sm:$0xff] %vm255, 0.0
        %264 = vst.msk [vmem:[#allocation2 + $0x40] sm:$0xff] %vm255, 0.0
        %265 = vst.msk [vmem:[#allocation2 + $0x48] sm:$0xff] %vm255, 0.0
        %266 = vst.msk [vmem:[#allocation2 + $0x50] sm:$0xff] %vm255, 0.0
        %267 = vst.msk [vmem:[#allocation2 + $0x58] sm:$0xff] %vm255, 0.0
        %268 = vst.msk [vmem:[#allocation2 + $0x60] sm:$0xff] %vm255, 0.0
        %269 = vst.msk [vmem:[#allocation2 + $0x68] sm:$0xff] %vm255, 0.0
        %270 = vst.msk [vmem:[#allocation2 + $0x70] sm:$0xff] %vm255, 0.0
        %271 = vst.msk [vmem:[#allocation2 + $0x78] sm:$0xff] %vm255, 0.0
      $region36: #{feature_sample.1} parent=31 // pred_fallthru
        _
      %s272 = sld [smem:[#allocation4 + %s25]]
      %s273 = sadd.s32 %s272, %s26
      %s274 = smul.u32 %s273, 256
      %v275 = vlaneseq
      %v276 = vand.u32 %v275, 127
      %v277 = vadd.s32 %v276, 128
      %v278 = vstv %s274
      %v279 = vadd.s32 %v276, %v278
      %v280 = vadd.s32 %v277, %v278
      %v281 = vld [vmem:[%s227] sm:$0xff]
      %v282 = vld [vmem:[%s227 + $0x8] sm:$0xff]
      %v283 = vld [vmem:[%s227 + $0x10] sm:$0xff]
      %v284 = vld [vmem:[%s227 + $0x18] sm:$0xff]
      %v285 = vld [vmem:[%s227 + $0x20] sm:$0xff]
      %v286 = vld [vmem:[%s227 + $0x28] sm:$0xff]
      %v287 = vld [vmem:[%s227 + $0x30] sm:$0xff]
      %v288 = vld [vmem:[%s227 + $0x38] sm:$0xff]
      %v289 = vld [vmem:[%s227 + $0x40] sm:$0xff]
      %v290 = vld [vmem:[%s227 + $0x48] sm:$0xff]
      %v291 = vld [vmem:[%s227 + $0x50] sm:$0xff]
      %v292 = vld [vmem:[%s227 + $0x58] sm:$0xff]
      %v293 = vld [vmem:[%s227 + $0x60] sm:$0xff]
      %v294 = vld [vmem:[%s227 + $0x68] sm:$0xff]
      %v295 = vld [vmem:[%s227 + $0x70] sm:$0xff]
      %v296 = vld [vmem:[%s227 + $0x78] sm:$0xff]
      %297 = vset.pattern.permute.xlu0 0
      %298 = vperm.xlu0 %297, %v281
      %v299 = vpop.permute.xlu0 %298
      %300 = vset.pattern.permute.xlu0 0
      %301 = vperm.xlu0 %300, %v282
      %v302 = vpop.permute.xlu0 %301
      %303 = vset.pattern.permute.xlu0 0
      %304 = vperm.xlu0 %303, %v283
      %v305 = vpop.permute.xlu0 %304
      %306 = vset.pattern.permute.xlu0 0
      %307 = vperm.xlu0 %306, %v284
      %v308 = vpop.permute.xlu0 %307
      %309 = vset.pattern.permute.xlu0 0
      %310 = vperm.xlu0 %309, %v285
      %v311 = vpop.permute.xlu0 %310
      %312 = vset.pattern.permute.xlu0 0
      %313 = vperm.xlu0 %312, %v286
      %v314 = vpop.permute.xlu0 %313
      %315 = vset.pattern.permute.xlu0 0
      %316 = vperm.xlu0 %315, %v287
      %v317 = vpop.permute.xlu0 %316
      %318 = vset.pattern.permute.xlu0 0
      %319 = vperm.xlu0 %318, %v288
      %v320 = vpop.permute.xlu0 %319
      %321 = vset.pattern.permute.xlu0 0
      %322 = vperm.xlu0 %321, %v289
      %v323 = vpop.permute.xlu0 %322
      %324 = vset.pattern.permute.xlu0 0
      %325 = vperm.xlu0 %324, %v290
      %v326 = vpop.permute.xlu0 %325
      %327 = vset.pattern.permute.xlu0 0
      %328 = vperm.xlu0 %327, %v291
      %v329 = vpop.permute.xlu0 %328
      %330 = vset.pattern.permute.xlu0 0
      %331 = vperm.xlu0 %330, %v292
      %v332 = vpop.permute.xlu0 %331
      %333 = vset.pattern.permute.xlu0 0
      %334 = vperm.xlu0 %333, %v293
      %v335 = vpop.permute.xlu0 %334
      %336 = vset.pattern.permute.xlu0 0
      %337 = vperm.xlu0 %336, %v294
      %v338 = vpop.permute.xlu0 %337
      %339 = vset.pattern.permute.xlu0 0
      %340 = vperm.xlu0 %339, %v295
      %v341 = vpop.permute.xlu0 %340
      %342 = vset.pattern.permute.xlu0 0
      %343 = vperm.xlu0 %342, %v296
      %v344 = vpop.permute.xlu0 %343
      %vm345 = vcmp.eq.s32.totalorder %v279, %v299
      %vm346 = vcmp.eq.s32.totalorder %v280, %v299
      %vm347 = vcmp.eq.s32.totalorder %v279, %v302
      %vm348 = vcmp.eq.s32.totalorder %v280, %v302
      %vm349 = vcmp.eq.s32.totalorder %v279, %v305
      %vm350 = vcmp.eq.s32.totalorder %v280, %v305
      %vm351 = vcmp.eq.s32.totalorder %v279, %v308
      %vm352 = vcmp.eq.s32.totalorder %v280, %v308
      %vm353 = vcmp.eq.s32.totalorder %v279, %v311
      %vm354 = vcmp.eq.s32.totalorder %v280, %v311
      %vm355 = vcmp.eq.s32.totalorder %v279, %v314
      %vm356 = vcmp.eq.s32.totalorder %v280, %v314
      %vm357 = vcmp.eq.s32.totalorder %v279, %v317
      %vm358 = vcmp.eq.s32.totalorder %v280, %v317
      %vm359 = vcmp.eq.s32.totalorder %v279, %v320
      %vm360 = vcmp.eq.s32.totalorder %v280, %v320
      %vm361 = vcmp.eq.s32.totalorder %v279, %v323
      %vm362 = vcmp.eq.s32.totalorder %v280, %v323
      %vm363 = vcmp.eq.s32.totalorder %v279, %v326
      %vm364 = vcmp.eq.s32.totalorder %v280, %v326
      %vm365 = vcmp.eq.s32.totalorder %v279, %v329
      %vm366 = vcmp.eq.s32.totalorder %v280, %v329
      %vm367 = vcmp.eq.s32.totalorder %v279, %v332
      %vm368 = vcmp.eq.s32.totalorder %v280, %v332
      %vm369 = vcmp.eq.s32.totalorder %v279, %v335
      %vm370 = vcmp.eq.s32.totalorder %v280, %v335
      %vm371 = vcmp.eq.s32.totalorder %v279, %v338
      %vm372 = vcmp.eq.s32.totalorder %v280, %v338
      %vm373 = vcmp.eq.s32.totalorder %v279, %v341
      %vm374 = vcmp.eq.s32.totalorder %v280, %v341
      %vm375 = vcmp.eq.s32.totalorder %v279, %v344
      %vm376 = vcmp.eq.s32.totalorder %v280, %v344
      %v377 = vld [vmem:[%s233] sm:$0xff]
      %v378 = vld [vmem:[%s233 + $0x8] sm:$0xff]
      %v379 = vld [vmem:[%s233 + $0x10] sm:$0xff]
      %v380 = vld [vmem:[%s233 + $0x18] sm:$0xff]
      %v381 = vld [vmem:[%s233 + $0x20] sm:$0xff]
      %v382 = vld [vmem:[%s233 + $0x28] sm:$0xff]
      %v383 = vld [vmem:[%s233 + $0x30] sm:$0xff]
      %v384 = vld [vmem:[%s233 + $0x38] sm:$0xff]
      %v385 = vld [vmem:[%s233 + $0x40] sm:$0xff]
      %v386 = vld [vmem:[%s233 + $0x48] sm:$0xff]
      %v387 = vld [vmem:[%s233 + $0x50] sm:$0xff]
      %v388 = vld [vmem:[%s233 + $0x58] sm:$0xff]
      %v389 = vld [vmem:[%s233 + $0x60] sm:$0xff]
      %v390 = vld [vmem:[%s233 + $0x68] sm:$0xff]
      %v391 = vld [vmem:[%s233 + $0x70] sm:$0xff]
      %v392 = vld [vmem:[%s233 + $0x78] sm:$0xff]
      %394 = vset.pattern.permute.xlu0 0
      %395 = vperm.xlu0 %394, %v377
      %v396 = vpop.permute.xlu0 %395
      %399 = vset.pattern.permute.xlu0 0
      %400 = vperm.xlu0 %399, %v378
      %v401 = vpop.permute.xlu0 %400
      %404 = vset.pattern.permute.xlu0 0
      %405 = vperm.xlu0 %404, %v379
      %v406 = vpop.permute.xlu0 %405
      %409 = vset.pattern.permute.xlu0 0
      %410 = vperm.xlu0 %409, %v380
      %v411 = vpop.permute.xlu0 %410
      %414 = vset.pattern.permute.xlu0 0
      %415 = vperm.xlu0 %414, %v381
      %v416 = vpop.permute.xlu0 %415
      %419 = vset.pattern.permute.xlu0 0
      %420 = vperm.xlu0 %419, %v382
      %v421 = vpop.permute.xlu0 %420
      %424 = vset.pattern.permute.xlu0 0
      %425 = vperm.xlu0 %424, %v383
      %v426 = vpop.permute.xlu0 %425
      %429 = vset.pattern.permute.xlu0 0
      %430 = vperm.xlu0 %429, %v384
      %v431 = vpop.permute.xlu0 %430
      %434 = vset.pattern.permute.xlu0 0
      %435 = vperm.xlu0 %434, %v385
      %v436 = vpop.permute.xlu0 %435
      %439 = vset.pattern.permute.xlu0 0
      %440 = vperm.xlu0 %439, %v386
      %v441 = vpop.permute.xlu0 %440
      %444 = vset.pattern.permute.xlu0 0
      %445 = vperm.xlu0 %444, %v387
      %v446 = vpop.permute.xlu0 %445
      %449 = vset.pattern.permute.xlu0 0
      %450 = vperm.xlu0 %449, %v388
      %v451 = vpop.permute.xlu0 %450
      %454 = vset.pattern.permute.xlu0 0
      %455 = vperm.xlu0 %454, %v389
      %v456 = vpop.permute.xlu0 %455
      %459 = vset.pattern.permute.xlu0 0
      %460 = vperm.xlu0 %459, %v390
      %v461 = vpop.permute.xlu0 %460
      %464 = vset.pattern.permute.xlu0 0
      %465 = vperm.xlu0 %464, %v391
      %v466 = vpop.permute.xlu0 %465
      %469 = vset.pattern.permute.xlu0 0
      %470 = vperm.xlu0 %469, %v392
      %v471 = vpop.permute.xlu0 %470
      %v473 = vsel %vm345, %v396, 0.0
      %v474 = vsel %vm346, %v396, 0.0
      %v475 = vsel %vm347, %v401, 0.0
      %v476 = vsel %vm348, %v401, 0.0
      %v477 = vsel %vm349, %v406, 0.0
      %v478 = vsel %vm350, %v406, 0.0
      %v479 = vsel %vm351, %v411, 0.0
      %v480 = vsel %vm352, %v411, 0.0
      %v481 = vsel %vm353, %v416, 0.0
      %v482 = vsel %vm354, %v416, 0.0
      %v483 = vsel %vm355, %v421, 0.0
      %v484 = vsel %vm356, %v421, 0.0
      %v485 = vsel %vm357, %v426, 0.0
      %v486 = vsel %vm358, %v426, 0.0
      %v487 = vsel %vm359, %v431, 0.0
      %v488 = vsel %vm360, %v431, 0.0
      %v489 = vsel %vm361, %v436, 0.0
      %v490 = vsel %vm362, %v436, 0.0
      %v491 = vsel %vm363, %v441, 0.0
      %v492 = vsel %vm364, %v441, 0.0
      %v493 = vsel %vm365, %v446, 0.0
      %v494 = vsel %vm366, %v446, 0.0
      %v495 = vsel %vm367, %v451, 0.0
      %v496 = vsel %vm368, %v451, 0.0
      %v497 = vsel %vm369, %v456, 0.0
      %v498 = vsel %vm370, %v456, 0.0
      %v499 = vsel %vm371, %v461, 0.0
      %v500 = vsel %vm372, %v461, 0.0
      %v501 = vsel %vm373, %v466, 0.0
      %v502 = vsel %vm374, %v466, 0.0
      %v503 = vsel %vm375, %v471, 0.0
      %v504 = vsel %vm376, %v471, 0.0
      %505 = vset.pattern.permute.xlu0 1
      %506 = vperm.xlu0 %505, %v281
      %v507 = vpop.permute.xlu0 %506
      %508 = vset.pattern.permute.xlu0 1
      %509 = vperm.xlu0 %508, %v282
      %v510 = vpop.permute.xlu0 %509
      %511 = vset.pattern.permute.xlu0 1
      %512 = vperm.xlu0 %511, %v283
      %v513 = vpop.permute.xlu0 %512
      %514 = vset.pattern.permute.xlu0 1
      %515 = vperm.xlu0 %514, %v284
      %v516 = vpop.permute.xlu0 %515
      %517 = vset.pattern.permute.xlu0 1
      %518 = vperm.xlu0 %517, %v285
      %v519 = vpop.permute.xlu0 %518
      %520 = vset.pattern.permute.xlu0 1
      %521 = vperm.xlu0 %520, %v286
      %v522 = vpop.permute.xlu0 %521
      %523 = vset.pattern.permute.xlu0 1
      %524 = vperm.xlu0 %523, %v287
      %v525 = vpop.permute.xlu0 %524
      %526 = vset.pattern.permute.xlu0 1
      %527 = vperm.xlu0 %526, %v288
      %v528 = vpop.permute.xlu0 %527
      %529 = vset.pattern.permute.xlu0 1
      %530 = vperm.xlu0 %529, %v289
      %v531 = vpop.permute.xlu0 %530
      %532 = vset.pattern.permute.xlu0 1
      %533 = vperm.xlu0 %532, %v290
      %v534 = vpop.permute.xlu0 %533
      %535 = vset.pattern.permute.xlu0 1
      %536 = vperm.xlu0 %535, %v291
      %v537 = vpop.permute.xlu0 %536
      %538 = vset.pattern.permute.xlu0 1
      %539 = vperm.xlu0 %538, %v292
      %v540 = vpop.permute.xlu0 %539
      %541 = vset.pattern.permute.xlu0 1
      %542 = vperm.xlu0 %541, %v293
      %v543 = vpop.permute.xlu0 %542
      %544 = vset.pattern.permute.xlu0 1
      %545 = vperm.xlu0 %544, %v294
      %v546 = vpop.permute.xlu0 %545
      %547 = vset.pattern.permute.xlu0 1
      %548 = vperm.xlu0 %547, %v295
      %v549 = vpop.permute.xlu0 %548
      %550 = vset.pattern.permute.xlu0 1
      %551 = vperm.xlu0 %550, %v296
      %v552 = vpop.permute.xlu0 %551
      %vm553 = vcmp.eq.s32.totalorder %v279, %v507
      %vm554 = vcmp.eq.s32.totalorder %v280, %v507
      %vm555 = vcmp.eq.s32.totalorder %v279, %v510
      %vm556 = vcmp.eq.s32.totalorder %v280, %v510
      %vm557 = vcmp.eq.s32.totalorder %v279, %v513
      %vm558 = vcmp.eq.s32.totalorder %v280, %v513
      %vm559 = vcmp.eq.s32.totalorder %v279, %v516
      %vm560 = vcmp.eq.s32.totalorder %v280, %v516
      %vm561 = vcmp.eq.s32.totalorder %v279, %v519
      %vm562 = vcmp.eq.s32.totalorder %v280, %v519
      %vm563 = vcmp.eq.s32.totalorder %v279, %v522
      %vm564 = vcmp.eq.s32.totalorder %v280, %v522
      %vm565 = vcmp.eq.s32.totalorder %v279, %v525
      %vm566 = vcmp.eq.s32.totalorder %v280, %v525
      %vm567 = vcmp.eq.s32.totalorder %v279, %v528
      %vm568 = vcmp.eq.s32.totalorder %v280, %v528
      %vm569 = vcmp.eq.s32.totalorder %v279, %v531
      %vm570 = vcmp.eq.s32.totalorder %v280, %v531
      %vm571 = vcmp.eq.s32.totalorder %v279, %v534
      %vm572 = vcmp.eq.s32.totalorder %v280, %v534
      %vm573 = vcmp.eq.s32.totalorder %v279, %v537
      %vm574 = vcmp.eq.s32.totalorder %v280, %v537
      %vm575 = vcmp.eq.s32.totalorder %v279, %v540
      %vm576 = vcmp.eq.s32.totalorder %v280, %v540
      %vm577 = vcmp.eq.s32.totalorder %v279, %v543
      %vm578 = vcmp.eq.s32.totalorder %v280, %v543
      %vm579 = vcmp.eq.s32.totalorder %v279, %v546
      %vm580 = vcmp.eq.s32.totalorder %v280, %v546
      %vm581 = vcmp.eq.s32.totalorder %v279, %v549
      %vm582 = vcmp.eq.s32.totalorder %v280, %v549
      %vm583 = vcmp.eq.s32.totalorder %v279, %v552
      %vm584 = vcmp.eq.s32.totalorder %v280, %v552
      %585 = vset.pattern.permute.xlu0 1
      %586 = vperm.xlu0 %585, %v377
      %v587 = vpop.permute.xlu0 %586
      %589 = vset.pattern.permute.xlu0 1
      %590 = vperm.xlu0 %589, %v378
      %v591 = vpop.permute.xlu0 %590
      %593 = vset.pattern.permute.xlu0 1
      %594 = vperm.xlu0 %593, %v379
      %v595 = vpop.permute.xlu0 %594
      %597 = vset.pattern.permute.xlu0 1
      %598 = vperm.xlu0 %597, %v380
      %v599 = vpop.permute.xlu0 %598
      %601 = vset.pattern.permute.xlu0 1
      %602 = vperm.xlu0 %601, %v381
      %v603 = vpop.permute.xlu0 %602
      %605 = vset.pattern.permute.xlu0 1
      %606 = vperm.xlu0 %605, %v382
      %v607 = vpop.permute.xlu0 %606
      %609 = vset.pattern.permute.xlu0 1
      %610 = vperm.xlu0 %609, %v383
      %v611 = vpop.permute.xlu0 %610
      %613 = vset.pattern.permute.xlu0 1
      %614 = vperm.xlu0 %613, %v384
      %v615 = vpop.permute.xlu0 %614
      %617 = vset.pattern.permute.xlu0 1
      %618 = vperm.xlu0 %617, %v385
      %v619 = vpop.permute.xlu0 %618
      %621 = vset.pattern.permute.xlu0 1
      %622 = vperm.xlu0 %621, %v386
      %v623 = vpop.permute.xlu0 %622
      %625 = vset.pattern.permute.xlu0 1
      %626 = vperm.xlu0 %625, %v387
      %v627 = vpop.permute.xlu0 %626
      %629 = vset.pattern.permute.xlu0 1
      %630 = vperm.xlu0 %629, %v388
      %v631 = vpop.permute.xlu0 %630
      %633 = vset.pattern.permute.xlu0 1
      %634 = vperm.xlu0 %633, %v389
      %v635 = vpop.permute.xlu0 %634
      %637 = vset.pattern.permute.xlu0 1
      %638 = vperm.xlu0 %637, %v390
      %v639 = vpop.permute.xlu0 %638
      %641 = vset.pattern.permute.xlu0 1
      %642 = vperm.xlu0 %641, %v391
      %v643 = vpop.permute.xlu0 %642
      %645 = vset.pattern.permute.xlu0 1
      %646 = vperm.xlu0 %645, %v392
      %v647 = vpop.permute.xlu0 %646
      %v649 = vsel %vm553, %v587, 0.0
      %v650 = vsel %vm554, %v587, 0.0
      %v651 = vsel %vm555, %v591, 0.0
      %v652 = vsel %vm556, %v591, 0.0
      %v653 = vsel %vm557, %v595, 0.0
      %v654 = vsel %vm558, %v595, 0.0
      %v655 = vsel %vm559, %v599, 0.0
      %v656 = vsel %vm560, %v599, 0.0
      %v657 = vsel %vm561, %v603, 0.0
      %v658 = vsel %vm562, %v603, 0.0
      %v659 = vsel %vm563, %v607, 0.0
      %v660 = vsel %vm564, %v607, 0.0
      %v661 = vsel %vm565, %v611, 0.0
      %v662 = vsel %vm566, %v611, 0.0
      %v663 = vsel %vm567, %v615, 0.0
      %v664 = vsel %vm568, %v615, 0.0
      %v665 = vsel %vm569, %v619, 0.0
      %v666 = vsel %vm570, %v619, 0.0
      %v667 = vsel %vm571, %v623, 0.0
      %v668 = vsel %vm572, %v623, 0.0
      %v669 = vsel %vm573, %v627, 0.0
      %v670 = vsel %vm574, %v627, 0.0
      %v671 = vsel %vm575, %v631, 0.0
      %v672 = vsel %vm576, %v631, 0.0
      %v673 = vsel %vm577, %v635, 0.0
      %v674 = vsel %vm578, %v635, 0.0
      %v675 = vsel %vm579, %v639, 0.0
      %v676 = vsel %vm580, %v639, 0.0
      %v677 = vsel %vm581, %v643, 0.0
      %v678 = vsel %vm582, %v643, 0.0
      %v679 = vsel %vm583, %v647, 0.0
      %v680 = vsel %vm584, %v647, 0.0
      %v681 = vadd.f32 %v473, %v649
      %v682 = vadd.f32 %v474, %v650
      %v683 = vadd.f32 %v475, %v651
      %v684 = vadd.f32 %v476, %v652
      %v685 = vadd.f32 %v477, %v653
      %v686 = vadd.f32 %v478, %v654
      %v687 = vadd.f32 %v479, %v655
      %v688 = vadd.f32 %v480, %v656
      %v689 = vadd.f32 %v481, %v657
      %v690 = vadd.f32 %v482, %v658
      %v691 = vadd.f32 %v483, %v659
      %v692 = vadd.f32 %v484, %v660
      %v693 = vadd.f32 %v485, %v661
      %v694 = vadd.f32 %v486, %v662
      %v695 = vadd.f32 %v487, %v663
      %v696 = vadd.f32 %v488, %v664
      %v697 = vadd.f32 %v489, %v665
      %v698 = vadd.f32 %v490, %v666
      %v699 = vadd.f32 %v491, %v667
      %v700 = vadd.f32 %v492, %v668
      %v701 = vadd.f32 %v493, %v669
      %v702 = vadd.f32 %v494, %v670
      %v703 = vadd.f32 %v495, %v671
      %v704 = vadd.f32 %v496, %v672
      %v705 = vadd.f32 %v497, %v673
      %v706 = vadd.f32 %v498, %v674
      %v707 = vadd.f32 %v499, %v675
      %v708 = vadd.f32 %v500, %v676
      %v709 = vadd.f32 %v501, %v677
      %v710 = vadd.f32 %v502, %v678
      %v711 = vadd.f32 %v503, %v679
      %v712 = vadd.f32 %v504, %v680
      %713 = vset.pattern.permute.xlu0 2
      %714 = vperm.xlu0 %713, %v281
      %v715 = vpop.permute.xlu0 %714
      %716 = vset.pattern.permute.xlu0 2
      %717 = vperm.xlu0 %716, %v282
      %v718 = vpop.permute.xlu0 %717
      %719 = vset.pattern.permute.xlu0 2
      %720 = vperm.xlu0 %719, %v283
      %v721 = vpop.permute.xlu0 %720
      %722 = vset.pattern.permute.xlu0 2
      %723 = vperm.xlu0 %722, %v284
      %v724 = vpop.permute.xlu0 %723
      %725 = vset.pattern.permute.xlu0 2
      %726 = vperm.xlu0 %725, %v285
      %v727 = vpop.permute.xlu0 %726
      %728 = vset.pattern.permute.xlu0 2
      %729 = vperm.xlu0 %728, %v286
      %v730 = vpop.permute.xlu0 %729
      %731 = vset.pattern.permute.xlu0 2
      %732 = vperm.xlu0 %731, %v287
      %v733 = vpop.permute.xlu0 %732
      %734 = vset.pattern.permute.xlu0 2
      %735 = vperm.xlu0 %734, %v288
      %v736 = vpop.permute.xlu0 %735
      %737 = vset.pattern.permute.xlu0 2
      %738 = vperm.xlu0 %737, %v289
      %v739 = vpop.permute.xlu0 %738
      %740 = vset.pattern.permute.xlu0 2
      %741 = vperm.xlu0 %740, %v290
      %v742 = vpop.permute.xlu0 %741
      %743 = vset.pattern.permute.xlu0 2
      %744 = vperm.xlu0 %743, %v291
      %v745 = vpop.permute.xlu0 %744
      %746 = vset.pattern.permute.xlu0 2
      %747 = vperm.xlu0 %746, %v292
      %v748 = vpop.permute.xlu0 %747
      %749 = vset.pattern.permute.xlu0 2
      %750 = vperm.xlu0 %749, %v293
      %v751 = vpop.permute.xlu0 %750
      %752 = vset.pattern.permute.xlu0 2
      %753 = vperm.xlu0 %752, %v294
      %v754 = vpop.permute.xlu0 %753
      %755 = vset.pattern.permute.xlu0 2
      %756 = vperm.xlu0 %755, %v295
      %v757 = vpop.permute.xlu0 %756
      %758 = vset.pattern.permute.xlu0 2
      %759 = vperm.xlu0 %758, %v296
      %v760 = vpop.permute.xlu0 %759
      %vm761 = vcmp.eq.s32.totalorder %v279, %v715
      %vm762 = vcmp.eq.s32.totalorder %v280, %v715
      %vm763 = vcmp.eq.s32.totalorder %v279, %v718
      %vm764 = vcmp.eq.s32.totalorder %v280, %v718
      %vm765 = vcmp.eq.s32.totalorder %v279, %v721
      %vm766 = vcmp.eq.s32.totalorder %v280, %v721
      %vm767 = vcmp.eq.s32.totalorder %v279, %v724
      %vm768 = vcmp.eq.s32.totalorder %v280, %v724
      %vm769 = vcmp.eq.s32.totalorder %v279, %v727
      %vm770 = vcmp.eq.s32.totalorder %v280, %v727
      %vm771 = vcmp.eq.s32.totalorder %v279, %v730
      %vm772 = vcmp.eq.s32.totalorder %v280, %v730
      %vm773 = vcmp.eq.s32.totalorder %v279, %v733
      %vm774 = vcmp.eq.s32.totalorder %v280, %v733
      %vm775 = vcmp.eq.s32.totalorder %v279, %v736
      %vm776 = vcmp.eq.s32.totalorder %v280, %v736
      %vm777 = vcmp.eq.s32.totalorder %v279, %v739
      %vm778 = vcmp.eq.s32.totalorder %v280, %v739
      %vm779 = vcmp.eq.s32.totalorder %v279, %v742
      %vm780 = vcmp.eq.s32.totalorder %v280, %v742
      %vm781 = vcmp.eq.s32.totalorder %v279, %v745
      %vm782 = vcmp.eq.s32.totalorder %v280, %v745
      %vm783 = vcmp.eq.s32.totalorder %v279, %v748
      %vm784 = vcmp.eq.s32.totalorder %v280, %v748
      %vm785 = vcmp.eq.s32.totalorder %v279, %v751
      %vm786 = vcmp.eq.s32.totalorder %v280, %v751
      %vm787 = vcmp.eq.s32.totalorder %v279, %v754
      %vm788 = vcmp.eq.s32.totalorder %v280, %v754
      %vm789 = vcmp.eq.s32.totalorder %v279, %v757
      %vm790 = vcmp.eq.s32.totalorder %v280, %v757
      %vm791 = vcmp.eq.s32.totalorder %v279, %v760
      %vm792 = vcmp.eq.s32.totalorder %v280, %v760
      %793 = vset.pattern.permute.xlu0 2
      %794 = vperm.xlu0 %793, %v377
      %v795 = vpop.permute.xlu0 %794
      %797 = vset.pattern.permute.xlu0 2
      %798 = vperm.xlu0 %797, %v378
      %v799 = vpop.permute.xlu0 %798
      %801 = vset.pattern.permute.xlu0 2
      %802 = vperm.xlu0 %801, %v379
      %v803 = vpop.permute.xlu0 %802
      %805 = vset.pattern.permute.xlu0 2
      %806 = vperm.xlu0 %805, %v380
      %v807 = vpop.permute.xlu0 %806
      %809 = vset.pattern.permute.xlu0 2
      %810 = vperm.xlu0 %809, %v381
      %v811 = vpop.permute.xlu0 %810
      %813 = vset.pattern.permute.xlu0 2
      %814 = vperm.xlu0 %813, %v382
      %v815 = vpop.permute.xlu0 %814
      %817 = vset.pattern.permute.xlu0 2
      %818 = vperm.xlu0 %817, %v383
      %v819 = vpop.permute.xlu0 %818
      %821 = vset.pattern.permute.xlu0 2
      %822 = vperm.xlu0 %821, %v384
      %v823 = vpop.permute.xlu0 %822
      %825 = vset.pattern.permute.xlu0 2
      %826 = vperm.xlu0 %825, %v385
      %v827 = vpop.permute.xlu0 %826
      %829 = vset.pattern.permute.xlu0 2
      %830 = vperm.xlu0 %829, %v386
      %v831 = vpop.permute.xlu0 %830
      %833 = vset.pattern.permute.xlu0 2
      %834 = vperm.xlu0 %833, %v387
      %v835 = vpop.permute.xlu0 %834
      %837 = vset.pattern.permute.xlu0 2
      %838 = vperm.xlu0 %837, %v388
      %v839 = vpop.permute.xlu0 %838
      %841 = vset.pattern.permute.xlu0 2
      %842 = vperm.xlu0 %841, %v389
      %v843 = vpop.permute.xlu0 %842
      %845 = vset.pattern.permute.xlu0 2
      %846 = vperm.xlu0 %845, %v390
      %v847 = vpop.permute.xlu0 %846
      %849 = vset.pattern.permute.xlu0 2
      %850 = vperm.xlu0 %849, %v391
      %v851 = vpop.permute.xlu0 %850
      %853 = vset.pattern.permute.xlu0 2
      %854 = vperm.xlu0 %853, %v392
      %v855 = vpop.permute.xlu0 %854
      %v857 = vsel %vm761, %v795, 0.0
      %v858 = vsel %vm762, %v795, 0.0
      %v859 = vsel %vm763, %v799, 0.0
      %v860 = vsel %vm764, %v799, 0.0
      %v861 = vsel %vm765, %v803, 0.0
      %v862 = vsel %vm766, %v803, 0.0
      %v863 = vsel %vm767, %v807, 0.0
      %v864 = vsel %vm768, %v807, 0.0
      %v865 = vsel %vm769, %v811, 0.0
      %v866 = vsel %vm770, %v811, 0.0
      %v867 = vsel %vm771, %v815, 0.0
      %v868 = vsel %vm772, %v815, 0.0
      %v869 = vsel %vm773, %v819, 0.0
      %v870 = vsel %vm774, %v819, 0.0
      %v871 = vsel %vm775, %v823, 0.0
      %v872 = vsel %vm776, %v823, 0.0
      %v873 = vsel %vm777, %v827, 0.0
      %v874 = vsel %vm778, %v827, 0.0
      %v875 = vsel %vm779, %v831, 0.0
      %v876 = vsel %vm780, %v831, 0.0
      %v877 = vsel %vm781, %v835, 0.0
      %v878 = vsel %vm782, %v835, 0.0
      %v879 = vsel %vm783, %v839, 0.0
      %v880 = vsel %vm784, %v839, 0.0
      %v881 = vsel %vm785, %v843, 0.0
      %v882 = vsel %vm786, %v843, 0.0
      %v883 = vsel %vm787, %v847, 0.0
      %v884 = vsel %vm788, %v847, 0.0
      %v885 = vsel %vm789, %v851, 0.0
      %v886 = vsel %vm790, %v851, 0.0
      %v887 = vsel %vm791, %v855, 0.0
      %v888 = vsel %vm792, %v855, 0.0
      %v889 = vadd.f32 %v681, %v857
      %v890 = vadd.f32 %v682, %v858
      %v891 = vadd.f32 %v683, %v859
      %v892 = vadd.f32 %v684, %v860
      %v893 = vadd.f32 %v685, %v861
      %v894 = vadd.f32 %v686, %v862
      %v895 = vadd.f32 %v687, %v863
      %v896 = vadd.f32 %v688, %v864
      %v897 = vadd.f32 %v689, %v865
      %v898 = vadd.f32 %v690, %v866
      %v899 = vadd.f32 %v691, %v867
      %v900 = vadd.f32 %v692, %v868
      %v901 = vadd.f32 %v693, %v869
      %v902 = vadd.f32 %v694, %v870
      %v903 = vadd.f32 %v695, %v871
      %v904 = vadd.f32 %v696, %v872
      %v905 = vadd.f32 %v697, %v873
      %v906 = vadd.f32 %v698, %v874
      %v907 = vadd.f32 %v699, %v875
      %v908 = vadd.f32 %v700, %v876
      %v909 = vadd.f32 %v701, %v877
      %v910 = vadd.f32 %v702, %v878
      %v911 = vadd.f32 %v703, %v879
      %v912 = vadd.f32 %v704, %v880
      %v913 = vadd.f32 %v705, %v881
      %v914 = vadd.f32 %v706, %v882
      %v915 = vadd.f32 %v707, %v883
      %v916 = vadd.f32 %v708, %v884
      %v917 = vadd.f32 %v709, %v885
      %v918 = vadd.f32 %v710, %v886
      %v919 = vadd.f32 %v711, %v887
      %v920 = vadd.f32 %v712, %v888
      %921 = vset.pattern.permute.xlu0 3
      %922 = vperm.xlu0 %921, %v281
      %v923 = vpop.permute.xlu0 %922
      %924 = vset.pattern.permute.xlu0 3
      %925 = vperm.xlu0 %924, %v282
      %v926 = vpop.permute.xlu0 %925
      %927 = vset.pattern.permute.xlu0 3
      %928 = vperm.xlu0 %927, %v283
      %v929 = vpop.permute.xlu0 %928
      %930 = vset.pattern.permute.xlu0 3
      %931 = vperm.xlu0 %930, %v284
      %v932 = vpop.permute.xlu0 %931
      %933 = vset.pattern.permute.xlu0 3
      %934 = vperm.xlu0 %933, %v285
      %v935 = vpop.permute.xlu0 %934
      %936 = vset.pattern.permute.xlu0 3
      %937 = vperm.xlu0 %936, %v286
      %v938 = vpop.permute.xlu0 %937
      %939 = vset.pattern.permute.xlu0 3
      %940 = vperm.xlu0 %939, %v287
      %v941 = vpop.permute.xlu0 %940
      %942 = vset.pattern.permute.xlu0 3
      %943 = vperm.xlu0 %942, %v288
      %v944 = vpop.permute.xlu0 %943
      %945 = vset.pattern.permute.xlu0 3
      %946 = vperm.xlu0 %945, %v289
      %v947 = vpop.permute.xlu0 %946
      %948 = vset.pattern.permute.xlu0 3
      %949 = vperm.xlu0 %948, %v290
      %v950 = vpop.permute.xlu0 %949
      %951 = vset.pattern.permute.xlu0 3
      %952 = vperm.xlu0 %951, %v291
      %v953 = vpop.permute.xlu0 %952
      %954 = vset.pattern.permute.xlu0 3
      %955 = vperm.xlu0 %954, %v292
      %v956 = vpop.permute.xlu0 %955
      %957 = vset.pattern.permute.xlu0 3
      %958 = vperm.xlu0 %957, %v293
      %v959 = vpop.permute.xlu0 %958
      %960 = vset.pattern.permute.xlu0 3
      %961 = vperm.xlu0 %960, %v294
      %v962 = vpop.permute.xlu0 %961
      %963 = vset.pattern.permute.xlu0 3
      %964 = vperm.xlu0 %963, %v295
      %v965 = vpop.permute.xlu0 %964
      %966 = vset.pattern.permute.xlu0 3
      %967 = vperm.xlu0 %966, %v296
      %v968 = vpop.permute.xlu0 %967
      %vm969 = vcmp.eq.s32.totalorder %v279, %v923
      %vm970 = vcmp.eq.s32.totalorder %v280, %v923
      %vm971 = vcmp.eq.s32.totalorder %v279, %v926
      %vm972 = vcmp.eq.s32.totalorder %v280, %v926
      %vm973 = vcmp.eq.s32.totalorder %v279, %v929
      %vm974 = vcmp.eq.s32.totalorder %v280, %v929
      %vm975 = vcmp.eq.s32.totalorder %v279, %v932
      %vm976 = vcmp.eq.s32.totalorder %v280, %v932
      %vm977 = vcmp.eq.s32.totalorder %v279, %v935
      %vm978 = vcmp.eq.s32.totalorder %v280, %v935
      %vm979 = vcmp.eq.s32.totalorder %v279, %v938
      %vm980 = vcmp.eq.s32.totalorder %v280, %v938
      %vm981 = vcmp.eq.s32.totalorder %v279, %v941
      %vm982 = vcmp.eq.s32.totalorder %v280, %v941
      %vm983 = vcmp.eq.s32.totalorder %v279, %v944
      %vm984 = vcmp.eq.s32.totalorder %v280, %v944
      %vm985 = vcmp.eq.s32.totalorder %v279, %v947
      %vm986 = vcmp.eq.s32.totalorder %v280, %v947
      %vm987 = vcmp.eq.s32.totalorder %v279, %v950
      %vm988 = vcmp.eq.s32.totalorder %v280, %v950
      %vm989 = vcmp.eq.s32.totalorder %v279, %v953
      %vm990 = vcmp.eq.s32.totalorder %v280, %v953
      %vm991 = vcmp.eq.s32.totalorder %v279, %v956
      %vm992 = vcmp.eq.s32.totalorder %v280, %v956
      %vm993 = vcmp.eq.s32.totalorder %v279, %v959
      %vm994 = vcmp.eq.s32.totalorder %v280, %v959
      %vm995 = vcmp.eq.s32.totalorder %v279, %v962
      %vm996 = vcmp.eq.s32.totalorder %v280, %v962
      %vm997 = vcmp.eq.s32.totalorder %v279, %v965
      %vm998 = vcmp.eq.s32.totalorder %v280, %v965
      %vm999 = vcmp.eq.s32.totalorder %v279, %v968
      %vm1000 = vcmp.eq.s32.totalorder %v280, %v968
      %1001 = vset.pattern.permute.xlu0 3
      %1002 = vperm.xlu0 %1001, %v377
      %v1003 = vpop.permute.xlu0 %1002
      %1005 = vset.pattern.permute.xlu0 3
      %1006 = vperm.xlu0 %1005, %v378
      %v1007 = vpop.permute.xlu0 %1006
      %1009 = vset.pattern.permute.xlu0 3
      %1010 = vperm.xlu0 %1009, %v379
      %v1011 = vpop.permute.xlu0 %1010
      %1013 = vset.pattern.permute.xlu0 3
      %1014 = vperm.xlu0 %1013, %v380
      %v1015 = vpop.permute.xlu0 %1014
      %1017 = vset.pattern.permute.xlu0 3
      %1018 = vperm.xlu0 %1017, %v381
      %v1019 = vpop.permute.xlu0 %1018
      %1021 = vset.pattern.permute.xlu0 3
      %1022 = vperm.xlu0 %1021, %v382
      %v1023 = vpop.permute.xlu0 %1022
      %1025 = vset.pattern.permute.xlu0 3
      %1026 = vperm.xlu0 %1025, %v383
      %v1027 = vpop.permute.xlu0 %1026
      %1029 = vset.pattern.permute.xlu0 3
      %1030 = vperm.xlu0 %1029, %v384
      %v1031 = vpop.permute.xlu0 %1030
      %1033 = vset.pattern.permute.xlu0 3
      %1034 = vperm.xlu0 %1033, %v385
      %v1035 = vpop.permute.xlu0 %1034
      %1037 = vset.pattern.permute.xlu0 3
      %1038 = vperm.xlu0 %1037, %v386
      %v1039 = vpop.permute.xlu0 %1038
      %1041 = vset.pattern.permute.xlu0 3
      %1042 = vperm.xlu0 %1041, %v387
      %v1043 = vpop.permute.xlu0 %1042
      %1045 = vset.pattern.permute.xlu0 3
      %1046 = vperm.xlu0 %1045, %v388
      %v1047 = vpop.permute.xlu0 %1046
      %1049 = vset.pattern.permute.xlu0 3
      %1050 = vperm.xlu0 %1049, %v389
      %v1051 = vpop.permute.xlu0 %1050
      %1053 = vset.pattern.permute.xlu0 3
      %1054 = vperm.xlu0 %1053, %v390
      %v1055 = vpop.permute.xlu0 %1054
      %1057 = vset.pattern.permute.xlu0 3
      %1058 = vperm.xlu0 %1057, %v391
      %v1059 = vpop.permute.xlu0 %1058
      %1061 = vset.pattern.permute.xlu0 3
      %1062 = vperm.xlu0 %1061, %v392
      %v1063 = vpop.permute.xlu0 %1062
      %v1065 = vsel %vm969, %v1003, 0.0
      %v1066 = vsel %vm970, %v1003, 0.0
      %v1067 = vsel %vm971, %v1007, 0.0
      %v1068 = vsel %vm972, %v1007, 0.0
      %v1069 = vsel %vm973, %v1011, 0.0
      %v1070 = vsel %vm974, %v1011, 0.0
      %v1071 = vsel %vm975, %v1015, 0.0
      %v1072 = vsel %vm976, %v1015, 0.0
      %v1073 = vsel %vm977, %v1019, 0.0
      %v1074 = vsel %vm978, %v1019, 0.0
      %v1075 = vsel %vm979, %v1023, 0.0
      %v1076 = vsel %vm980, %v1023, 0.0
      %v1077 = vsel %vm981, %v1027, 0.0
      %v1078 = vsel %vm982, %v1027, 0.0
      %v1079 = vsel %vm983, %v1031, 0.0
      %v1080 = vsel %vm984, %v1031, 0.0
      %v1081 = vsel %vm985, %v1035, 0.0
      %v1082 = vsel %vm986, %v1035, 0.0
      %v1083 = vsel %vm987, %v1039, 0.0
      %v1084 = vsel %vm988, %v1039, 0.0
      %v1085 = vsel %vm989, %v1043, 0.0
      %v1086 = vsel %vm990, %v1043, 0.0
      %v1087 = vsel %vm991, %v1047, 0.0
      %v1088 = vsel %vm992, %v1047, 0.0
      %v1089 = vsel %vm993, %v1051, 0.0
      %v1090 = vsel %vm994, %v1051, 0.0
      %v1091 = vsel %vm995, %v1055, 0.0
      %v1092 = vsel %vm996, %v1055, 0.0
      %v1093 = vsel %vm997, %v1059, 0.0
      %v1094 = vsel %vm998, %v1059, 0.0
      %v1095 = vsel %vm999, %v1063, 0.0
      %v1096 = vsel %vm1000, %v1063, 0.0
      %v1097 = vadd.f32 %v889, %v1065
      %v1098 = vadd.f32 %v890, %v1066
      %v1099 = vadd.f32 %v891, %v1067
      %v1100 = vadd.f32 %v892, %v1068
      %v1101 = vadd.f32 %v893, %v1069
      %v1102 = vadd.f32 %v894, %v1070
      %v1103 = vadd.f32 %v895, %v1071
      %v1104 = vadd.f32 %v896, %v1072
      %v1105 = vadd.f32 %v897, %v1073
      %v1106 = vadd.f32 %v898, %v1074
      %v1107 = vadd.f32 %v899, %v1075
      %v1108 = vadd.f32 %v900, %v1076
      %v1109 = vadd.f32 %v901, %v1077
      %v1110 = vadd.f32 %v902, %v1078
      %v1111 = vadd.f32 %v903, %v1079
      %v1112 = vadd.f32 %v904, %v1080
      %v1113 = vadd.f32 %v905, %v1081
      %v1114 = vadd.f32 %v906, %v1082
      %v1115 = vadd.f32 %v907, %v1083
      %v1116 = vadd.f32 %v908, %v1084
      %v1117 = vadd.f32 %v909, %v1085
      %v1118 = vadd.f32 %v910, %v1086
      %v1119 = vadd.f32 %v911, %v1087
      %v1120 = vadd.f32 %v912, %v1088
      %v1121 = vadd.f32 %v913, %v1089
      %v1122 = vadd.f32 %v914, %v1090
      %v1123 = vadd.f32 %v915, %v1091
      %v1124 = vadd.f32 %v916, %v1092
      %v1125 = vadd.f32 %v917, %v1093
      %v1126 = vadd.f32 %v918, %v1094
      %v1127 = vadd.f32 %v919, %v1095
      %v1128 = vadd.f32 %v920, %v1096
      %v1129 = vld [vmem:[%s241] sm:$0xff]
      %v1130 = vld [vmem:[%s241 + $0x8] sm:$0xff]
      %v1131 = vld [vmem:[%s241 + $0x10] sm:$0xff]
      %v1132 = vld [vmem:[%s241 + $0x18] sm:$0xff]
      %v1133 = vld [vmem:[%s241 + $0x20] sm:$0xff]
      %v1134 = vld [vmem:[%s241 + $0x28] sm:$0xff]
      %v1135 = vld [vmem:[%s241 + $0x30] sm:$0xff]
      %v1136 = vld [vmem:[%s241 + $0x38] sm:$0xff]
      %v1137 = vld [vmem:[%s241 + $0x40] sm:$0xff]
      %v1138 = vld [vmem:[%s241 + $0x48] sm:$0xff]
      %v1139 = vld [vmem:[%s241 + $0x50] sm:$0xff]
      %v1140 = vld [vmem:[%s241 + $0x58] sm:$0xff]
      %v1141 = vld [vmem:[%s241 + $0x60] sm:$0xff]
      %v1142 = vld [vmem:[%s241 + $0x68] sm:$0xff]
      %v1143 = vld [vmem:[%s241 + $0x70] sm:$0xff]
      %v1144 = vld [vmem:[%s241 + $0x78] sm:$0xff]
      %v1145 = vld [vmem:[%s241 + $0x80] sm:$0xff]
      %v1146 = vld [vmem:[%s241 + $0x88] sm:$0xff]
      %v1147 = vld [vmem:[%s241 + $0x90] sm:$0xff]
      %v1148 = vld [vmem:[%s241 + $0x98] sm:$0xff]
      %v1149 = vld [vmem:[%s241 + $0xa0] sm:$0xff]
      %v1150 = vld [vmem:[%s241 + $0xa8] sm:$0xff]
      %v1151 = vld [vmem:[%s241 + $0xb0] sm:$0xff]
      %v1152 = vld [vmem:[%s241 + $0xb8] sm:$0xff]
      %v1153 = vld [vmem:[%s241 + $0xc0] sm:$0xff]
      %v1154 = vld [vmem:[%s241 + $0xc8] sm:$0xff]
      %v1155 = vld [vmem:[%s241 + $0xd0] sm:$0xff]
      %v1156 = vld [vmem:[%s241 + $0xd8] sm:$0xff]
      %v1157 = vld [vmem:[%s241 + $0xe0] sm:$0xff]
      %v1158 = vld [vmem:[%s241 + $0xe8] sm:$0xff]
      %v1159 = vld [vmem:[%s241 + $0xf0] sm:$0xff]
      %v1160 = vld [vmem:[%s241 + $0xf8] sm:$0xff]
      %v1161 = vld [vmem:[#allocation2] sm:$0xff]
      %v1162 = vld [vmem:[#allocation2 + $0x8] sm:$0xff]
      %v1163 = vld [vmem:[#allocation2 + $0x10] sm:$0xff]
      %v1164 = vld [vmem:[#allocation2 + $0x18] sm:$0xff]
      %v1165 = vld [vmem:[#allocation2 + $0x20] sm:$0xff]
      %v1166 = vld [vmem:[#allocation2 + $0x28] sm:$0xff]
      %v1167 = vld [vmem:[#allocation2 + $0x30] sm:$0xff]
      %v1168 = vld [vmem:[#allocation2 + $0x38] sm:$0xff]
      %v1169 = vld [vmem:[#allocation2 + $0x40] sm:$0xff]
      %v1170 = vld [vmem:[#allocation2 + $0x48] sm:$0xff]
      %v1171 = vld [vmem:[#allocation2 + $0x50] sm:$0xff]
      %v1172 = vld [vmem:[#allocation2 + $0x58] sm:$0xff]
      %v1173 = vld [vmem:[#allocation2 + $0x60] sm:$0xff]
      %v1174 = vld [vmem:[#allocation2 + $0x68] sm:$0xff]
      %v1175 = vld [vmem:[#allocation2 + $0x70] sm:$0xff]
      %v1176 = vld [vmem:[#allocation2 + $0x78] sm:$0xff]
      %1177 = vmatprep.subr.mxu0 0.0
      %v1178 = vand.u32 %v1129, 4294901760
      %1179 = vmatpush1.msra.mxu0 %v1178
      %1180 = vmatprep.subr.mxu0 0.0
      %v1181 = vand.u32 %v1130, 4294901760
      %1182 = vmatpush1.msra.mxu0 %v1181
      %1183 = vmatprep.subr.mxu0 0.0
      %v1184 = vand.u32 %v1131, 4294901760
      %1185 = vmatpush1.msra.mxu0 %v1184
      %1186 = vmatprep.subr.mxu0 0.0
      %v1187 = vand.u32 %v1132, 4294901760
      %1188 = vmatpush1.msra.mxu0 %v1187
      %1189 = vmatprep.subr.mxu0 0.0
      %v1190 = vand.u32 %v1133, 4294901760
      %1191 = vmatpush1.msra.mxu0 %v1190
      %1192 = vmatprep.subr.mxu0 0.0
      %v1193 = vand.u32 %v1134, 4294901760
      %1194 = vmatpush1.msra.mxu0 %v1193
      %1195 = vmatprep.subr.mxu0 0.0
      %v1196 = vand.u32 %v1135, 4294901760
      %1197 = vmatpush1.msra.mxu0 %v1196
      %1198 = vmatprep.subr.mxu0 0.0
      %v1199 = vand.u32 %v1136, 4294901760
      %1200 = vmatpush1.msra.mxu0 %v1199
      %1201 = vmatprep.subr.mxu0 0.0
      %v1202 = vand.u32 %v1137, 4294901760
      %1203 = vmatpush1.msra.mxu0 %v1202
      %1204 = vmatprep.subr.mxu0 0.0
      %v1205 = vand.u32 %v1138, 4294901760
      %1206 = vmatpush1.msra.mxu0 %v1205
      %1207 = vmatprep.subr.mxu0 0.0
      %v1208 = vand.u32 %v1139, 4294901760
      %1209 = vmatpush1.msra.mxu0 %v1208
      %1210 = vmatprep.subr.mxu0 0.0
      %v1211 = vand.u32 %v1140, 4294901760
      %1212 = vmatpush1.msra.mxu0 %v1211
      %1213 = vmatprep.subr.mxu0 0.0
      %v1214 = vand.u32 %v1141, 4294901760
      %1215 = vmatpush1.msra.mxu0 %v1214
      %1216 = vmatprep.subr.mxu0 0.0
      %v1217 = vand.u32 %v1142, 4294901760
      %1218 = vmatpush1.msra.mxu0 %v1217
      %1219 = vmatprep.subr.mxu0 0.0
      %v1220 = vand.u32 %v1143, 4294901760
      %1221 = vmatpush1.msra.mxu0 %v1220
      %1222 = vmatprep.subr.mxu0 0.0
      %v1223 = vand.u32 %v1144, 4294901760
      %1224 = vmatpush1.msra.mxu0 %v1223
      %1225 = vmatprep.subr.mxu0 0.0
      %v1226 = vand.u32 %v1145, 4294901760
      %1227 = vmatpush1.msra.mxu0 %v1226
      %1228 = vmatprep.subr.mxu0 0.0
      %v1229 = vand.u32 %v1146, 4294901760
      %1230 = vmatpush1.msra.mxu0 %v1229
      %1231 = vmatprep.subr.mxu0 0.0
      %v1232 = vand.u32 %v1147, 4294901760
      %1233 = vmatpush1.msra.mxu0 %v1232
      %1234 = vmatprep.subr.mxu0 0.0
      %v1235 = vand.u32 %v1148, 4294901760
      %1236 = vmatpush1.msra.mxu0 %v1235
      %1237 = vmatprep.subr.mxu0 0.0
      %v1238 = vand.u32 %v1149, 4294901760
      %1239 = vmatpush1.msra.mxu0 %v1238
      %1240 = vmatprep.subr.mxu0 0.0
      %v1241 = vand.u32 %v1150, 4294901760
      %1242 = vmatpush1.msra.mxu0 %v1241
      %1243 = vmatprep.subr.mxu0 0.0
      %v1244 = vand.u32 %v1151, 4294901760
      %1245 = vmatpush1.msra.mxu0 %v1244
      %1246 = vmatprep.subr.mxu0 0.0
      %v1247 = vand.u32 %v1152, 4294901760
      %1248 = vmatpush1.msra.mxu0 %v1247
      %1249 = vmatprep.subr.mxu0 0.0
      %v1250 = vand.u32 %v1153, 4294901760
      %1251 = vmatpush1.msra.mxu0 %v1250
      %1252 = vmatprep.subr.mxu0 0.0
      %v1253 = vand.u32 %v1154, 4294901760
      %1254 = vmatpush1.msra.mxu0 %v1253
      %1255 = vmatprep.subr.mxu0 0.0
      %v1256 = vand.u32 %v1155, 4294901760
      %1257 = vmatpush1.msra.mxu0 %v1256
      %1258 = vmatprep.subr.mxu0 0.0
      %v1259 = vand.u32 %v1156, 4294901760
      %1260 = vmatpush1.msra.mxu0 %v1259
      %1261 = vmatprep.subr.mxu0 0.0
      %v1262 = vand.u32 %v1157, 4294901760
      %1263 = vmatpush1.msra.mxu0 %v1262
      %1264 = vmatprep.subr.mxu0 0.0
      %v1265 = vand.u32 %v1158, 4294901760
      %1266 = vmatpush1.msra.mxu0 %v1265
      %1267 = vmatprep.subr.mxu0 0.0
      %v1268 = vand.u32 %v1159, 4294901760
      %1269 = vmatpush1.msra.mxu0 %v1268
      %1270 = vmatprep.subr.mxu0 0.0
      %v1271 = vand.u32 %v1160, 4294901760
      %1272 = vmatpush1.msra.mxu0 %v1271
      %v1273 = vand.u32 %v1098, 4294901760
      %v1274 = vsub.f32 %v1098, %v1273
      %v1275 = vand.u32 %v1274, 4294901760
      %v1276 = vsub.f32 %v1274, %v1275
      %v1277 = vand.u32 %v1276, 4294901760
      %1278 = vmatprep.mubr.f32.mxu0 %v1277
      %v1279 = vand.u32 %v1097, 4294901760
      %v1280 = vsub.f32 %v1097, %v1279
      %v1281 = vand.u32 %v1280, 4294901760
      %v1282 = vsub.f32 %v1280, %v1281
      %v1283 = vand.u32 %v1282, 4294901760
      %1284 = vmatmul.mubr.f32.gmra.mrb[0].mxu0 %v1283
      %v1285 = vpop.f32.mrb[0].mxu0
      %v1286 = vadd.f32 0.0, %v1285
      %v1287 = vpop.f32.mrb[0].mxu0
      %v1288 = vand.u32 %v1100, 4294901760
      %v1289 = vsub.f32 %v1100, %v1288
      %v1290 = vand.u32 %v1289, 4294901760
      %v1291 = vsub.f32 %v1289, %v1290
      %v1292 = vand.u32 %v1291, 4294901760
      %1293 = vmatprep.mubr.f32.mxu0 %v1292
      %v1294 = vand.u32 %v1099, 4294901760
      %v1295 = vsub.f32 %v1099, %v1294
      %v1296 = vand.u32 %v1295, 4294901760
      %v1297 = vsub.f32 %v1295, %v1296
      %v1298 = vand.u32 %v1297, 4294901760
      %1299 = vmatmul.mubr.f32.gmra.mrb[0].mxu0 %v1298
      %v1300 = vpop.f32.mrb[0].mxu0
      %v1301 = vadd.f32 0.0, %v1300
      %v1302 = vpop.f32.mrb[0].mxu0
      %v1303 = vand.u32 %v1102, 4294901760
      %v1304 = vsub.f32 %v1102, %v1303
      %v1305 = vand.u32 %v1304, 4294901760
      %v1306 = vsub.f32 %v1304, %v1305
      %v1307 = vand.u32 %v1306, 4294901760
      %1308 = vmatprep.mubr.f32.mxu0 %v1307
      %v1309 = vand.u32 %v1101, 4294901760
      %v1310 = vsub.f32 %v1101, %v1309
      %v1311 = vand.u32 %v1310, 4294901760
      %v1312 = vsub.f32 %v1310, %v1311
      %v1313 = vand.u32 %v1312, 4294901760
      %1314 = vmatmul.mubr.f32.gmra.mrb[0].mxu0 %v1313
      %v1315 = vpop.f32.mrb[0].mxu0
      %v1316 = vadd.f32 0.0, %v1315
      %v1317 = vpop.f32.mrb[0].mxu0
      %v1318 = vand.u32 %v1104, 4294901760
      %v1319 = vsub.f32 %v1104, %v1318
      %v1320 = vand.u32 %v1319, 4294901760
      %v1321 = vsub.f32 %v1319, %v1320
      %v1322 = vand.u32 %v1321, 4294901760
      %1323 = vmatprep.mubr.f32.mxu0 %v1322
      %v1324 = vand.u32 %v1103, 4294901760
      %v1325 = vsub.f32 %v1103, %v1324
      %v1326 = vand.u32 %v1325, 4294901760
      %v1327 = vsub.f32 %v1325, %v1326
      %v1328 = vand.u32 %v1327, 4294901760
      %1329 = vmatmul.mubr.f32.gmra.mrb[0].mxu0 %v1328
      %v1330 = vpop.f32.mrb[0].mxu0
      %v1331 = vadd.f32 0.0, %v1330
      %v1332 = vpop.f32.mrb[0].mxu0
      %v1333 = vand.u32 %v1106, 4294901760
      %v1334 = vsub.f32 %v1106, %v1333
      %v1335 = vand.u32 %v1334, 4294901760
      %v1336 = vsub.f32 %v1334, %v1335
      %v1337 = vand.u32 %v1336, 4294901760
      %1338 = vmatprep.mubr.f32.mxu0 %v1337
      %v1339 = vand.u32 %v1105, 4294901760
      %v1340 = vsub.f32 %v1105, %v1339
      %v1341 = vand.u32 %v1340, 4294901760
      %v1342 = vsub.f32 %v1340, %v1341
      %v1343 = vand.u32 %v1342, 4294901760
      %1344 = vmatmul.mubr.f32.gmra.mrb[0].mxu0 %v1343
      %v1345 = vpop.f32.mrb[0].mxu0
      %v1346 = vadd.f32 0.0, %v1345
      %v1347 = vpop.f32.mrb[0].mxu0
      %v1348 = vand.u32 %v1108, 4294901760
      %v1349 = vsub.f32 %v1108, %v1348
      %v1350 = vand.u32 %v1349, 4294901760
      %v1351 = vsub.f32 %v1349, %v1350
      %v1352 = vand.u32 %v1351, 4294901760
      %1353 = vmatprep.mubr.f32.mxu0 %v1352
      %v1354 = vand.u32 %v1107, 4294901760
      %v1355 = vsub.f32 %v1107, %v1354
      %v1356 = vand.u32 %v1355, 4294901760
      %v1357 = vsub.f32 %v1355, %v1356
      %v1358 = vand.u32 %v1357, 4294901760
      %1359 = vmatmul.mubr.f32.gmra.mrb[0].mxu0 %v1358
      %v1360 = vpop.f32.mrb[0].mxu0
      %v1361 = vadd.f32 0.0, %v1360
      %v1362 = vpop.f32.mrb[0].mxu0
      %v1363 = vand.u32 %v1110, 4294901760
      %v1364 = vsub.f32 %v1110, %v1363
      %v1365 = vand.u32 %v1364, 4294901760
      %v1366 = vsub.f32 %v1364, %v1365
      %v1367 = vand.u32 %v1366, 4294901760
      %1368 = vmatprep.mubr.f32.mxu0 %v1367
      %v1369 = vand.u32 %v1109, 4294901760
      %v1370 = vsub.f32 %v1109, %v1369
      %v1371 = vand.u32 %v1370, 4294901760
      %v1372 = vsub.f32 %v1370, %v1371
      %v1373 = vand.u32 %v1372, 4294901760
      %1374 = vmatmul.mubr.f32.gmra.mrb[0].mxu0 %v1373
      %v1375 = vpop.f32.mrb[0].mxu0
      %v1376 = vadd.f32 0.0, %v1375
      %v1377 = vpop.f32.mrb[0].mxu0
      %v1378 = vand.u32 %v1112, 4294901760
      %v1379 = vsub.f32 %v1112, %v1378
      %v1380 = vand.u32 %v1379, 4294901760
      %v1381 = vsub.f32 %v1379, %v1380
      %v1382 = vand.u32 %v1381, 4294901760
      %1383 = vmatprep.mubr.f32.mxu0 %v1382
      %v1384 = vand.u32 %v1111, 4294901760
      %v1385 = vsub.f32 %v1111, %v1384
      %v1386 = vand.u32 %v1385, 4294901760
      %v1387 = vsub.f32 %v1385, %v1386
      %v1388 = vand.u32 %v1387, 4294901760
      %1389 = vmatmul.mubr.f32.gmra.mrb[0].mxu0 %v1388
      %v1390 = vpop.f32.mrb[0].mxu0
      %v1391 = vadd.f32 0.0, %v1390
      %v1392 = vpop.f32.mrb[0].mxu0
      %v1393 = vand.u32 %v1114, 4294901760
      %v1394 = vsub.f32 %v1114, %v1393
      %v1395 = vand.u32 %v1394, 4294901760
      %v1396 = vsub.f32 %v1394, %v1395
      %v1397 = vand.u32 %v1396, 4294901760
      %1398 = vmatprep.mubr.f32.mxu0 %v1397
      %v1399 = vand.u32 %v1113, 4294901760
      %v1400 = vsub.f32 %v1113, %v1399
      %v1401 = vand.u32 %v1400, 4294901760
      %v1402 = vsub.f32 %v1400, %v1401
      %v1403 = vand.u32 %v1402, 4294901760
      %1404 = vmatmul.mubr.f32.gmra.mrb[0].mxu0 %v1403
      %v1405 = vpop.f32.mrb[0].mxu0
      %v1406 = vadd.f32 0.0, %v1405
      %v1407 = vpop.f32.mrb[0].mxu0
      %v1408 = vand.u32 %v1116, 4294901760
      %v1409 = vsub.f32 %v1116, %v1408
      %v1410 = vand.u32 %v1409, 4294901760
      %v1411 = vsub.f32 %v1409, %v1410
      %v1412 = vand.u32 %v1411, 4294901760
      %1413 = vmatprep.mubr.f32.mxu0 %v1412
      %v1414 = vand.u32 %v1115, 4294901760
      %v1415 = vsub.f32 %v1115, %v1414
      %v1416 = vand.u32 %v1415, 4294901760
      %v1417 = vsub.f32 %v1415, %v1416
      %v1418 = vand.u32 %v1417, 4294901760
      %1419 = vmatmul.mubr.f32.gmra.mrb[0].mxu0 %v1418
      %v1420 = vpop.f32.mrb[0].mxu0
      %v1421 = vadd.f32 0.0, %v1420
      %v1422 = vpop.f32.mrb[0].mxu0
      %v1423 = vand.u32 %v1118, 4294901760
      %v1424 = vsub.f32 %v1118, %v1423
      %v1425 = vand.u32 %v1424, 4294901760
      %v1426 = vsub.f32 %v1424, %v1425
      %v1427 = vand.u32 %v1426, 4294901760
      %1428 = vmatprep.mubr.f32.mxu0 %v1427
      %v1429 = vand.u32 %v1117, 4294901760
      %v1430 = vsub.f32 %v1117, %v1429
      %v1431 = vand.u32 %v1430, 4294901760
      %v1432 = vsub.f32 %v1430, %v1431
      %v1433 = vand.u32 %v1432, 4294901760
      %1434 = vmatmul.mubr.f32.gmra.mrb[0].mxu0 %v1433
      %v1435 = vpop.f32.mrb[0].mxu0
      %v1436 = vadd.f32 0.0, %v1435
      %v1437 = vpop.f32.mrb[0].mxu0
      %v1438 = vand.u32 %v1120, 4294901760
      %v1439 = vsub.f32 %v1120, %v1438
      %v1440 = vand.u32 %v1439, 4294901760
      %v1441 = vsub.f32 %v1439, %v1440
      %v1442 = vand.u32 %v1441, 4294901760
      %1443 = vmatprep.mubr.f32.mxu0 %v1442
      %v1444 = vand.u32 %v1119, 4294901760
      %v1445 = vsub.f32 %v1119, %v1444
      %v1446 = vand.u32 %v1445, 4294901760
      %v1447 = vsub.f32 %v1445, %v1446
      %v1448 = vand.u32 %v1447, 4294901760
      %1449 = vmatmul.mubr.f32.gmra.mrb[0].mxu0 %v1448
      %v1450 = vpop.f32.mrb[0].mxu0
      %v1451 = vadd.f32 0.0, %v1450
      %v1452 = vpop.f32.mrb[0].mxu0
      %v1453 = vand.u32 %v1122, 4294901760
      %v1454 = vsub.f32 %v1122, %v1453
      %v1455 = vand.u32 %v1454, 4294901760
      %v1456 = vsub.f32 %v1454, %v1455
      %v1457 = vand.u32 %v1456, 4294901760
      %1458 = vmatprep.mubr.f32.mxu0 %v1457
      %v1459 = vand.u32 %v1121, 4294901760
      %v1460 = vsub.f32 %v1121, %v1459
      %v1461 = vand.u32 %v1460, 4294901760
      %v1462 = vsub.f32 %v1460, %v1461
      %v1463 = vand.u32 %v1462, 4294901760
      %1464 = vmatmul.mubr.f32.gmra.mrb[0].mxu0 %v1463
      %v1465 = vpop.f32.mrb[0].mxu0
      %v1466 = vadd.f32 0.0, %v1465
      %v1467 = vpop.f32.mrb[0].mxu0
      %v1468 = vand.u32 %v1124, 4294901760
      %v1469 = vsub.f32 %v1124, %v1468
      %v1470 = vand.u32 %v1469, 4294901760
      %v1471 = vsub.f32 %v1469, %v1470
      %v1472 = vand.u32 %v1471, 4294901760
      %1473 = vmatprep.mubr.f32.mxu0 %v1472
      %v1474 = vand.u32 %v1123, 4294901760
      %v1475 = vsub.f32 %v1123, %v1474
      %v1476 = vand.u32 %v1475, 4294901760
      %v1477 = vsub.f32 %v1475, %v1476
      %v1478 = vand.u32 %v1477, 4294901760
      %1479 = vmatmul.mubr.f32.gmra.mrb[0].mxu0 %v1478
      %v1480 = vpop.f32.mrb[0].mxu0
      %v1481 = vadd.f32 0.0, %v1480
      %v1482 = vpop.f32.mrb[0].mxu0
      %v1483 = vand.u32 %v1126, 4294901760
      %v1484 = vsub.f32 %v1126, %v1483
      %v1485 = vand.u32 %v1484, 4294901760
      %v1486 = vsub.f32 %v1484, %v1485
      %v1487 = vand.u32 %v1486, 4294901760
      %1488 = vmatprep.mubr.f32.mxu0 %v1487
      %v1489 = vand.u32 %v1125, 4294901760
      %v1490 = vsub.f32 %v1125, %v1489
      %v1491 = vand.u32 %v1490, 4294901760
      %v1492 = vsub.f32 %v1490, %v1491
      %v1493 = vand.u32 %v1492, 4294901760
      %1494 = vmatmul.mubr.f32.gmra.mrb[0].mxu0 %v1493
      %v1495 = vpop.f32.mrb[0].mxu0
      %v1496 = vadd.f32 0.0, %v1495
      %v1497 = vpop.f32.mrb[0].mxu0
      %v1498 = vand.u32 %v1128, 4294901760
      %v1499 = vsub.f32 %v1128, %v1498
      %v1500 = vand.u32 %v1499, 4294901760
      %v1501 = vsub.f32 %v1499, %v1500
      %v1502 = vand.u32 %v1501, 4294901760
      %1503 = vmatprep.mubr.f32.mxu0 %v1502
      %v1504 = vand.u32 %v1127, 4294901760
      %v1505 = vsub.f32 %v1127, %v1504
      %v1506 = vand.u32 %v1505, 4294901760
      %v1507 = vsub.f32 %v1505, %v1506
      %v1508 = vand.u32 %v1507, 4294901760
      %1509 = vmatmul.mubr.f32.gmra.mrb[0].mxu0 %v1508
      %v1510 = vpop.f32.mrb[0].mxu0
      %v1511 = vadd.f32 0.0, %v1510
      %v1512 = vpop.f32.mrb[0].mxu0
      %1513 = vdwg.mxu0
      %1514 = vmatprep.subr.mxu0 0.0
      %v1515 = vand.u32 %v1129, 4294901760
      %v1516 = vsub.f32 %v1129, %v1515
      %v1517 = vand.u32 %v1516, 4294901760
      %v1518 = vsub.f32 %v1516, %v1517
      %v1519 = vand.u32 %v1518, 4294901760
      %1520 = vmatpush1.msra.mxu0 %v1519
      %1521 = vmatprep.subr.mxu0 0.0
      %v1522 = vand.u32 %v1130, 4294901760
      %v1523 = vsub.f32 %v1130, %v1522
      %v1524 = vand.u32 %v1523, 4294901760
      %v1525 = vsub.f32 %v1523, %v1524
      %v1526 = vand.u32 %v1525, 4294901760
      %1527 = vmatpush1.msra.mxu0 %v1526
      %1528 = vmatprep.subr.mxu0 0.0
      %v1529 = vand.u32 %v1131, 4294901760
      %v1530 = vsub.f32 %v1131, %v1529
      %v1531 = vand.u32 %v1530, 4294901760
      %v1532 = vsub.f32 %v1530, %v1531
      %v1533 = vand.u32 %v1532, 4294901760
      %1534 = vmatpush1.msra.mxu0 %v1533
      %1535 = vmatprep.subr.mxu0 0.0
      %v1536 = vand.u32 %v1132, 4294901760
      %v1537 = vsub.f32 %v1132, %v1536
      %v1538 = vand.u32 %v1537, 4294901760
      %v1539 = vsub.f32 %v1537, %v1538
      %v1540 = vand.u32 %v1539, 4294901760
      %1541 = vmatpush1.msra.mxu0 %v1540
      %1542 = vmatprep.subr.mxu0 0.0
      %v1543 = vand.u32 %v1133, 4294901760
      %v1544 = vsub.f32 %v1133, %v1543
      %v1545 = vand.u32 %v1544, 4294901760
      %v1546 = vsub.f32 %v1544, %v1545
      %v1547 = vand.u32 %v1546, 4294901760
      %1548 = vmatpush1.msra.mxu0 %v1547
      %1549 = vmatprep.subr.mxu0 0.0
      %v1550 = vand.u32 %v1134, 4294901760
      %v1551 = vsub.f32 %v1134, %v1550
      %v1552 = vand.u32 %v1551, 4294901760
      %v1553 = vsub.f32 %v1551, %v1552
      %v1554 = vand.u32 %v1553, 4294901760
      %1555 = vmatpush1.msra.mxu0 %v1554
      %1556 = vmatprep.subr.mxu0 0.0
      %v1557 = vand.u32 %v1135, 4294901760
      %v1558 = vsub.f32 %v1135, %v1557
      %v1559 = vand.u32 %v1558, 4294901760
      %v1560 = vsub.f32 %v1558, %v1559
      %v1561 = vand.u32 %v1560, 4294901760
      %1562 = vmatpush1.msra.mxu0 %v1561
      %1563 = vmatprep.subr.mxu0 0.0
      %v1564 = vand.u32 %v1136, 4294901760
      %v1565 = vsub.f32 %v1136, %v1564
      %v1566 = vand.u32 %v1565, 4294901760
      %v1567 = vsub.f32 %v1565, %v1566
      %v1568 = vand.u32 %v1567, 4294901760
      %1569 = vmatpush1.msra.mxu0 %v1568
      %1570 = vmatprep.subr.mxu0 0.0
      %v1571 = vand.u32 %v1137, 4294901760
      %v1572 = vsub.f32 %v1137, %v1571
      %v1573 = vand.u32 %v1572, 4294901760
      %v1574 = vsub.f32 %v1572, %v1573
      %v1575 = vand.u32 %v1574, 4294901760
      %1576 = vmatpush1.msra.mxu0 %v1575
      %1577 = vmatprep.subr.mxu0 0.0
      %v1578 = vand.u32 %v1138, 4294901760
      %v1579 = vsub.f32 %v1138, %v1578
      %v1580 = vand.u32 %v1579, 4294901760
      %v1581 = vsub.f32 %v1579, %v1580
      %v1582 = vand.u32 %v1581, 4294901760
      %1583 = vmatpush1.msra.mxu0 %v1582
      %1584 = vmatprep.subr.mxu0 0.0
      %v1585 = vand.u32 %v1139, 4294901760
      %v1586 = vsub.f32 %v1139, %v1585
      %v1587 = vand.u32 %v1586, 4294901760
      %v1588 = vsub.f32 %v1586, %v1587
      %v1589 = vand.u32 %v1588, 4294901760
      %1590 = vmatpush1.msra.mxu0 %v1589
      %1591 = vmatprep.subr.mxu0 0.0
      %v1592 = vand.u32 %v1140, 4294901760
      %v1593 = vsub.f32 %v1140, %v1592
      %v1594 = vand.u32 %v1593, 4294901760
      %v1595 = vsub.f32 %v1593, %v1594
      %v1596 = vand.u32 %v1595, 4294901760
      %1597 = vmatpush1.msra.mxu0 %v1596
      %1598 = vmatprep.subr.mxu0 0.0
      %v1599 = vand.u32 %v1141, 4294901760
      %v1600 = vsub.f32 %v1141, %v1599
      %v1601 = vand.u32 %v1600, 4294901760
      %v1602 = vsub.f32 %v1600, %v1601
      %v1603 = vand.u32 %v1602, 4294901760
      %1604 = vmatpush1.msra.mxu0 %v1603
      %1605 = vmatprep.subr.mxu0 0.0
      %v1606 = vand.u32 %v1142, 4294901760
      %v1607 = vsub.f32 %v1142, %v1606
      %v1608 = vand.u32 %v1607, 4294901760
      %v1609 = vsub.f32 %v1607, %v1608
      %v1610 = vand.u32 %v1609, 4294901760
      %1611 = vmatpush1.msra.mxu0 %v1610
      %1612 = vmatprep.subr.mxu0 0.0
      %v1613 = vand.u32 %v1143, 4294901760
      %v1614 = vsub.f32 %v1143, %v1613
      %v1615 = vand.u32 %v1614, 4294901760
      %v1616 = vsub.f32 %v1614, %v1615
      %v1617 = vand.u32 %v1616, 4294901760
      %1618 = vmatpush1.msra.mxu0 %v1617
      %1619 = vmatprep.subr.mxu0 0.0
      %v1620 = vand.u32 %v1144, 4294901760
      %v1621 = vsub.f32 %v1144, %v1620
      %v1622 = vand.u32 %v1621, 4294901760
      %v1623 = vsub.f32 %v1621, %v1622
      %v1624 = vand.u32 %v1623, 4294901760
      %1625 = vmatpush1.msra.mxu0 %v1624
      %1626 = vmatprep.subr.mxu0 0.0
      %v1627 = vand.u32 %v1145, 4294901760
      %v1628 = vsub.f32 %v1145, %v1627
      %v1629 = vand.u32 %v1628, 4294901760
      %v1630 = vsub.f32 %v1628, %v1629
      %v1631 = vand.u32 %v1630, 4294901760
      %1632 = vmatpush1.msra.mxu0 %v1631
      %1633 = vmatprep.subr.mxu0 0.0
      %v1634 = vand.u32 %v1146, 4294901760
      %v1635 = vsub.f32 %v1146, %v1634
      %v1636 = vand.u32 %v1635, 4294901760
      %v1637 = vsub.f32 %v1635, %v1636
      %v1638 = vand.u32 %v1637, 4294901760
      %1639 = vmatpush1.msra.mxu0 %v1638
      %1640 = vmatprep.subr.mxu0 0.0
      %v1641 = vand.u32 %v1147, 4294901760
      %v1642 = vsub.f32 %v1147, %v1641
      %v1643 = vand.u32 %v1642, 4294901760
      %v1644 = vsub.f32 %v1642, %v1643
      %v1645 = vand.u32 %v1644, 4294901760
      %1646 = vmatpush1.msra.mxu0 %v1645
      %1647 = vmatprep.subr.mxu0 0.0
      %v1648 = vand.u32 %v1148, 4294901760
      %v1649 = vsub.f32 %v1148, %v1648
      %v1650 = vand.u32 %v1649, 4294901760
      %v1651 = vsub.f32 %v1649, %v1650
      %v1652 = vand.u32 %v1651, 4294901760
      %1653 = vmatpush1.msra.mxu0 %v1652
      %1654 = vmatprep.subr.mxu0 0.0
      %v1655 = vand.u32 %v1149, 4294901760
      %v1656 = vsub.f32 %v1149, %v1655
      %v1657 = vand.u32 %v1656, 4294901760
      %v1658 = vsub.f32 %v1656, %v1657
      %v1659 = vand.u32 %v1658, 4294901760
      %1660 = vmatpush1.msra.mxu0 %v1659
      %1661 = vmatprep.subr.mxu0 0.0
      %v1662 = vand.u32 %v1150, 4294901760
      %v1663 = vsub.f32 %v1150, %v1662
      %v1664 = vand.u32 %v1663, 4294901760
      %v1665 = vsub.f32 %v1663, %v1664
      %v1666 = vand.u32 %v1665, 4294901760
      %1667 = vmatpush1.msra.mxu0 %v1666
      %1668 = vmatprep.subr.mxu0 0.0
      %v1669 = vand.u32 %v1151, 4294901760
      %v1670 = vsub.f32 %v1151, %v1669
      %v1671 = vand.u32 %v1670, 4294901760
      %v1672 = vsub.f32 %v1670, %v1671
      %v1673 = vand.u32 %v1672, 4294901760
      %1674 = vmatpush1.msra.mxu0 %v1673
      %1675 = vmatprep.subr.mxu0 0.0
      %v1676 = vand.u32 %v1152, 4294901760
      %v1677 = vsub.f32 %v1152, %v1676
      %v1678 = vand.u32 %v1677, 4294901760
      %v1679 = vsub.f32 %v1677, %v1678
      %v1680 = vand.u32 %v1679, 4294901760
      %1681 = vmatpush1.msra.mxu0 %v1680
      %1682 = vmatprep.subr.mxu0 0.0
      %v1683 = vand.u32 %v1153, 4294901760
      %v1684 = vsub.f32 %v1153, %v1683
      %v1685 = vand.u32 %v1684, 4294901760
      %v1686 = vsub.f32 %v1684, %v1685
      %v1687 = vand.u32 %v1686, 4294901760
      %1688 = vmatpush1.msra.mxu0 %v1687
      %1689 = vmatprep.subr.mxu0 0.0
      %v1690 = vand.u32 %v1154, 4294901760
      %v1691 = vsub.f32 %v1154, %v1690
      %v1692 = vand.u32 %v1691, 4294901760
      %v1693 = vsub.f32 %v1691, %v1692
      %v1694 = vand.u32 %v1693, 4294901760
      %1695 = vmatpush1.msra.mxu0 %v1694
      %1696 = vmatprep.subr.mxu0 0.0
      %v1697 = vand.u32 %v1155, 4294901760
      %v1698 = vsub.f32 %v1155, %v1697
      %v1699 = vand.u32 %v1698, 4294901760
      %v1700 = vsub.f32 %v1698, %v1699
      %v1701 = vand.u32 %v1700, 4294901760
      %1702 = vmatpush1.msra.mxu0 %v1701
      %1703 = vmatprep.subr.mxu0 0.0
      %v1704 = vand.u32 %v1156, 4294901760
      %v1705 = vsub.f32 %v1156, %v1704
      %v1706 = vand.u32 %v1705, 4294901760
      %v1707 = vsub.f32 %v1705, %v1706
      %v1708 = vand.u32 %v1707, 4294901760
      %1709 = vmatpush1.msra.mxu0 %v1708
      %1710 = vmatprep.subr.mxu0 0.0
      %v1711 = vand.u32 %v1157, 4294901760
      %v1712 = vsub.f32 %v1157, %v1711
      %v1713 = vand.u32 %v1712, 4294901760
      %v1714 = vsub.f32 %v1712, %v1713
      %v1715 = vand.u32 %v1714, 4294901760
      %1716 = vmatpush1.msra.mxu0 %v1715
      %1717 = vmatprep.subr.mxu0 0.0
      %v1718 = vand.u32 %v1158, 4294901760
      %v1719 = vsub.f32 %v1158, %v1718
      %v1720 = vand.u32 %v1719, 4294901760
      %v1721 = vsub.f32 %v1719, %v1720
      %v1722 = vand.u32 %v1721, 4294901760
      %1723 = vmatpush1.msra.mxu0 %v1722
      %1724 = vmatprep.subr.mxu0 0.0
      %v1725 = vand.u32 %v1159, 4294901760
      %v1726 = vsub.f32 %v1159, %v1725
      %v1727 = vand.u32 %v1726, 4294901760
      %v1728 = vsub.f32 %v1726, %v1727
      %v1729 = vand.u32 %v1728, 4294901760
      %1730 = vmatpush1.msra.mxu0 %v1729
      %1731 = vmatprep.subr.mxu0 0.0
      %v1732 = vand.u32 %v1160, 4294901760
      %v1733 = vsub.f32 %v1160, %v1732
      %v1734 = vand.u32 %v1733, 4294901760
      %v1735 = vsub.f32 %v1733, %v1734
      %v1736 = vand.u32 %v1735, 4294901760
      %1737 = vmatpush1.msra.mxu0 %v1736
      %v1738 = vand.u32 %v1098, 4294901760
      %1739 = vmatprep.mubr.f32.mxu0 %v1738
      %v1740 = vand.u32 %v1097, 4294901760
      %1741 = vmatmul.mubr.f32.gmra.mrb[0].mxu0 %v1740
      %v1742 = vpop.f32.mrb[0].mxu0
      %v1743 = vadd.f32 %v1286, %v1742
      %v1744 = vpop.f32.mrb[0].mxu0
      %v1745 = vand.u32 %v1100, 4294901760
      %1746 = vmatprep.mubr.f32.mxu0 %v1745
      %v1747 = vand.u32 %v1099, 4294901760
      %1748 = vmatmul.mubr.f32.gmra.mrb[0].mxu0 %v1747
      %v1749 = vpop.f32.mrb[0].mxu0
      %v1750 = vadd.f32 %v1301, %v1749
      %v1751 = vpop.f32.mrb[0].mxu0
      %v1752 = vand.u32 %v1102, 4294901760
      %1753 = vmatprep.mubr.f32.mxu0 %v1752
      %v1754 = vand.u32 %v1101, 4294901760
      %1755 = vmatmul.mubr.f32.gmra.mrb[0].mxu0 %v1754
      %v1756 = vpop.f32.mrb[0].mxu0
      %v1757 = vadd.f32 %v1316, %v1756
      %v1758 = vpop.f32.mrb[0].mxu0
      %v1759 = vand.u32 %v1104, 4294901760
      %1760 = vmatprep.mubr.f32.mxu0 %v1759
      %v1761 = vand.u32 %v1103, 4294901760
      %1762 = vmatmul.mubr.f32.gmra.mrb[0].mxu0 %v1761
      %v1763 = vpop.f32.mrb[0].mxu0
      %v1764 = vadd.f32 %v1331, %v1763
      %v1765 = vpop.f32.mrb[0].mxu0
      %v1766 = vand.u32 %v1106, 4294901760
      %1767 = vmatprep.mubr.f32.mxu0 %v1766
      %v1768 = vand.u32 %v1105, 4294901760
      %1769 = vmatmul.mubr.f32.gmra.mrb[0].mxu0 %v1768
      %v1770 = vpop.f32.mrb[0].mxu0
      %v1771 = vadd.f32 %v1346, %v1770
      %v1772 = vpop.f32.mrb[0].mxu0
      %v1773 = vand.u32 %v1108, 4294901760
      %1774 = vmatprep.mubr.f32.mxu0 %v1773
      %v1775 = vand.u32 %v1107, 4294901760
      %1776 = vmatmul.mubr.f32.gmra.mrb[0].mxu0 %v1775
      %v1777 = vpop.f32.mrb[0].mxu0
      %v1778 = vadd.f32 %v1361, %v1777
      %v1779 = vpop.f32.mrb[0].mxu0
      %v1780 = vand.u32 %v1110, 4294901760
      %1781 = vmatprep.mubr.f32.mxu0 %v1780
      %v1782 = vand.u32 %v1109, 4294901760
      %1783 = vmatmul.mubr.f32.gmra.mrb[0].mxu0 %v1782
      %v1784 = vpop.f32.mrb[0].mxu0
      %v1785 = vadd.f32 %v1376, %v1784
      %v1786 = vpop.f32.mrb[0].mxu0
      %v1787 = vand.u32 %v1112, 4294901760
      %1788 = vmatprep.mubr.f32.mxu0 %v1787
      %v1789 = vand.u32 %v1111, 4294901760
      %1790 = vmatmul.mubr.f32.gmra.mrb[0].mxu0 %v1789
      %v1791 = vpop.f32.mrb[0].mxu0
      %v1792 = vadd.f32 %v1391, %v1791
      %v1793 = vpop.f32.mrb[0].mxu0
      %v1794 = vand.u32 %v1114, 4294901760
      %1795 = vmatprep.mubr.f32.mxu0 %v1794
      %v1796 = vand.u32 %v1113, 4294901760
      %1797 = vmatmul.mubr.f32.gmra.mrb[0].mxu0 %v1796
      %v1798 = vpop.f32.mrb[0].mxu0
      %v1799 = vadd.f32 %v1406, %v1798
      %v1800 = vpop.f32.mrb[0].mxu0
      %v1801 = vand.u32 %v1116, 4294901760
      %1802 = vmatprep.mubr.f32.mxu0 %v1801
      %v1803 = vand.u32 %v1115, 4294901760
      %1804 = vmatmul.mubr.f32.gmra.mrb[0].mxu0 %v1803
      %v1805 = vpop.f32.mrb[0].mxu0
      %v1806 = vadd.f32 %v1421, %v1805
      %v1807 = vpop.f32.mrb[0].mxu0
      %v1808 = vand.u32 %v1118, 4294901760
      %1809 = vmatprep.mubr.f32.mxu0 %v1808
      %v1810 = vand.u32 %v1117, 4294901760
      %1811 = vmatmul.mubr.f32.gmra.mrb[0].mxu0 %v1810
      %v1812 = vpop.f32.mrb[0].mxu0
      %v1813 = vadd.f32 %v1436, %v1812
      %v1814 = vpop.f32.mrb[0].mxu0
      %v1815 = vand.u32 %v1120, 4294901760
      %1816 = vmatprep.mubr.f32.mxu0 %v1815
      %v1817 = vand.u32 %v1119, 4294901760
      %1818 = vmatmul.mubr.f32.gmra.mrb[0].mxu0 %v1817
      %v1819 = vpop.f32.mrb[0].mxu0
      %v1820 = vadd.f32 %v1451, %v1819
      %v1821 = vpop.f32.mrb[0].mxu0
      %v1822 = vand.u32 %v1122, 4294901760
      %1823 = vmatprep.mubr.f32.mxu0 %v1822
      %v1824 = vand.u32 %v1121, 4294901760
      %1825 = vmatmul.mubr.f32.gmra.mrb[0].mxu0 %v1824
      %v1826 = vpop.f32.mrb[0].mxu0
      %v1827 = vadd.f32 %v1466, %v1826
      %v1828 = vpop.f32.mrb[0].mxu0
      %v1829 = vand.u32 %v1124, 4294901760
      %1830 = vmatprep.mubr.f32.mxu0 %v1829
      %v1831 = vand.u32 %v1123, 4294901760
      %1832 = vmatmul.mubr.f32.gmra.mrb[0].mxu0 %v1831
      %v1833 = vpop.f32.mrb[0].mxu0
      %v1834 = vadd.f32 %v1481, %v1833
      %v1835 = vpop.f32.mrb[0].mxu0
      %v1836 = vand.u32 %v1126, 4294901760
      %1837 = vmatprep.mubr.f32.mxu0 %v1836
      %v1838 = vand.u32 %v1125, 4294901760
      %1839 = vmatmul.mubr.f32.gmra.mrb[0].mxu0 %v1838
      %v1840 = vpop.f32.mrb[0].mxu0
      %v1841 = vadd.f32 %v1496, %v1840
      %v1842 = vpop.f32.mrb[0].mxu0
      %v1843 = vand.u32 %v1128, 4294901760
      %1844 = vmatprep.mubr.f32.mxu0 %v1843
      %v1845 = vand.u32 %v1127, 4294901760
      %1846 = vmatmul.mubr.f32.gmra.mrb[0].mxu0 %v1845
      %v1847 = vpop.f32.mrb[0].mxu0
      %v1848 = vadd.f32 %v1511, %v1847
      %v1849 = vpop.f32.mrb[0].mxu0
      %1850 = vdwg.mxu0
      %1851 = vmatprep.subr.mxu0 0.0
      %v1852 = vand.u32 %v1129, 4294901760
      %v1853 = vsub.f32 %v1129, %v1852
      %1854 = vmatpush1.msra.mxu0 %v1853
      %1855 = vmatprep.subr.mxu0 0.0
      %v1856 = vand.u32 %v1130, 4294901760
      %v1857 = vsub.f32 %v1130, %v1856
      %1858 = vmatpush1.msra.mxu0 %v1857
      %1859 = vmatprep.subr.mxu0 0.0
      %v1860 = vand.u32 %v1131, 4294901760
      %v1861 = vsub.f32 %v1131, %v1860
      %1862 = vmatpush1.msra.mxu0 %v1861
      %1863 = vmatprep.subr.mxu0 0.0
      %v1864 = vand.u32 %v1132, 4294901760
      %v1865 = vsub.f32 %v1132, %v1864
      %1866 = vmatpush1.msra.mxu0 %v1865
      %1867 = vmatprep.subr.mxu0 0.0
      %v1868 = vand.u32 %v1133, 4294901760
      %v1869 = vsub.f32 %v1133, %v1868
      %1870 = vmatpush1.msra.mxu0 %v1869
      %1871 = vmatprep.subr.mxu0 0.0
      %v1872 = vand.u32 %v1134, 4294901760
      %v1873 = vsub.f32 %v1134, %v1872
      %1874 = vmatpush1.msra.mxu0 %v1873
      %1875 = vmatprep.subr.mxu0 0.0
      %v1876 = vand.u32 %v1135, 4294901760
      %v1877 = vsub.f32 %v1135, %v1876
      %1878 = vmatpush1.msra.mxu0 %v1877
      %1879 = vmatprep.subr.mxu0 0.0
      %v1880 = vand.u32 %v1136, 4294901760
      %v1881 = vsub.f32 %v1136, %v1880
      %1882 = vmatpush1.msra.mxu0 %v1881
      %1883 = vmatprep.subr.mxu0 0.0
      %v1884 = vand.u32 %v1137, 4294901760
      %v1885 = vsub.f32 %v1137, %v1884
      %1886 = vmatpush1.msra.mxu0 %v1885
      %1887 = vmatprep.subr.mxu0 0.0
      %v1888 = vand.u32 %v1138, 4294901760
      %v1889 = vsub.f32 %v1138, %v1888
      %1890 = vmatpush1.msra.mxu0 %v1889
      %1891 = vmatprep.subr.mxu0 0.0
      %v1892 = vand.u32 %v1139, 4294901760
      %v1893 = vsub.f32 %v1139, %v1892
      %1894 = vmatpush1.msra.mxu0 %v1893
      %1895 = vmatprep.subr.mxu0 0.0
      %v1896 = vand.u32 %v1140, 4294901760
      %v1897 = vsub.f32 %v1140, %v1896
      %1898 = vmatpush1.msra.mxu0 %v1897
      %1899 = vmatprep.subr.mxu0 0.0
      %v1900 = vand.u32 %v1141, 4294901760
      %v1901 = vsub.f32 %v1141, %v1900
      %1902 = vmatpush1.msra.mxu0 %v1901
      %1903 = vmatprep.subr.mxu0 0.0
      %v1904 = vand.u32 %v1142, 4294901760
      %v1905 = vsub.f32 %v1142, %v1904
      %1906 = vmatpush1.msra.mxu0 %v1905
      %1907 = vmatprep.subr.mxu0 0.0
      %v1908 = vand.u32 %v1143, 4294901760
      %v1909 = vsub.f32 %v1143, %v1908
      %1910 = vmatpush1.msra.mxu0 %v1909
      %1911 = vmatprep.subr.mxu0 0.0
      %v1912 = vand.u32 %v1144, 4294901760
      %v1913 = vsub.f32 %v1144, %v1912
      %1914 = vmatpush1.msra.mxu0 %v1913
      %1915 = vmatprep.subr.mxu0 0.0
      %v1916 = vand.u32 %v1145, 4294901760
      %v1917 = vsub.f32 %v1145, %v1916
      %1918 = vmatpush1.msra.mxu0 %v1917
      %1919 = vmatprep.subr.mxu0 0.0
      %v1920 = vand.u32 %v1146, 4294901760
      %v1921 = vsub.f32 %v1146, %v1920
      %1922 = vmatpush1.msra.mxu0 %v1921
      %1923 = vmatprep.subr.mxu0 0.0
      %v1924 = vand.u32 %v1147, 4294901760
      %v1925 = vsub.f32 %v1147, %v1924
      %1926 = vmatpush1.msra.mxu0 %v1925
      %1927 = vmatprep.subr.mxu0 0.0
      %v1928 = vand.u32 %v1148, 4294901760
      %v1929 = vsub.f32 %v1148, %v1928
      %1930 = vmatpush1.msra.mxu0 %v1929
      %1931 = vmatprep.subr.mxu0 0.0
      %v1932 = vand.u32 %v1149, 4294901760
      %v1933 = vsub.f32 %v1149, %v1932
      %1934 = vmatpush1.msra.mxu0 %v1933
      %1935 = vmatprep.subr.mxu0 0.0
      %v1936 = vand.u32 %v1150, 4294901760
      %v1937 = vsub.f32 %v1150, %v1936
      %1938 = vmatpush1.msra.mxu0 %v1937
      %1939 = vmatprep.subr.mxu0 0.0
      %v1940 = vand.u32 %v1151, 4294901760
      %v1941 = vsub.f32 %v1151, %v1940
      %1942 = vmatpush1.msra.mxu0 %v1941
      %1943 = vmatprep.subr.mxu0 0.0
      %v1944 = vand.u32 %v1152, 4294901760
      %v1945 = vsub.f32 %v1152, %v1944
      %1946 = vmatpush1.msra.mxu0 %v1945
      %1947 = vmatprep.subr.mxu0 0.0
      %v1948 = vand.u32 %v1153, 4294901760
      %v1949 = vsub.f32 %v1153, %v1948
      %1950 = vmatpush1.msra.mxu0 %v1949
      %1951 = vmatprep.subr.mxu0 0.0
      %v1952 = vand.u32 %v1154, 4294901760
      %v1953 = vsub.f32 %v1154, %v1952
      %1954 = vmatpush1.msra.mxu0 %v1953
      %1955 = vmatprep.subr.mxu0 0.0
      %v1956 = vand.u32 %v1155, 4294901760
      %v1957 = vsub.f32 %v1155, %v1956
      %1958 = vmatpush1.msra.mxu0 %v1957
      %1959 = vmatprep.subr.mxu0 0.0
      %v1960 = vand.u32 %v1156, 4294901760
      %v1961 = vsub.f32 %v1156, %v1960
      %1962 = vmatpush1.msra.mxu0 %v1961
      %1963 = vmatprep.subr.mxu0 0.0
      %v1964 = vand.u32 %v1157, 4294901760
      %v1965 = vsub.f32 %v1157, %v1964
      %1966 = vmatpush1.msra.mxu0 %v1965
      %1967 = vmatprep.subr.mxu0 0.0
      %v1968 = vand.u32 %v1158, 4294901760
      %v1969 = vsub.f32 %v1158, %v1968
      %1970 = vmatpush1.msra.mxu0 %v1969
      %1971 = vmatprep.subr.mxu0 0.0
      %v1972 = vand.u32 %v1159, 4294901760
      %v1973 = vsub.f32 %v1159, %v1972
      %1974 = vmatpush1.msra.mxu0 %v1973
      %1975 = vmatprep.subr.mxu0 0.0
      %v1976 = vand.u32 %v1160, 4294901760
      %v1977 = vsub.f32 %v1160, %v1976
      %1978 = vmatpush1.msra.mxu0 %v1977
      %v1979 = vand.u32 %v1098, 4294901760
      %v1980 = vsub.f32 %v1098, %v1979
      %1981 = vmatprep.mubr.f32.mxu0 %v1980
      %v1982 = vand.u32 %v1097, 4294901760
      %v1983 = vsub.f32 %v1097, %v1982
      %1984 = vmatmul.mubr.f32.gmra.mrb[0].mxu0 %v1983
      %v1985 = vpop.f32.mrb[0].mxu0
      %v1986 = vadd.f32 %v1743, %v1985
      %v1987 = vpop.f32.mrb[0].mxu0
      %v1988 = vand.u32 %v1100, 4294901760
      %v1989 = vsub.f32 %v1100, %v1988
      %1990 = vmatprep.mubr.f32.mxu0 %v1989
      %v1991 = vand.u32 %v1099, 4294901760
      %v1992 = vsub.f32 %v1099, %v1991
      %1993 = vmatmul.mubr.f32.gmra.mrb[0].mxu0 %v1992
      %v1994 = vpop.f32.mrb[0].mxu0
      %v1995 = vadd.f32 %v1750, %v1994
      %v1996 = vpop.f32.mrb[0].mxu0
      %v1997 = vand.u32 %v1102, 4294901760
      %v1998 = vsub.f32 %v1102, %v1997
      %1999 = vmatprep.mubr.f32.mxu0 %v1998
      %v2000 = vand.u32 %v1101, 4294901760
      %v2001 = vsub.f32 %v1101, %v2000
      %2002 = vmatmul.mubr.f32.gmra.mrb[0].mxu0 %v2001
      %v2003 = vpop.f32.mrb[0].mxu0
      %v2004 = vadd.f32 %v1757, %v2003
      %v2005 = vpop.f32.mrb[0].mxu0
      %v2006 = vand.u32 %v1104, 4294901760
      %v2007 = vsub.f32 %v1104, %v2006
      %2008 = vmatprep.mubr.f32.mxu0 %v2007
      %v2009 = vand.u32 %v1103, 4294901760
      %v2010 = vsub.f32 %v1103, %v2009
      %2011 = vmatmul.mubr.f32.gmra.mrb[0].mxu0 %v2010
      %v2012 = vpop.f32.mrb[0].mxu0
      %v2013 = vadd.f32 %v1764, %v2012
      %v2014 = vpop.f32.mrb[0].mxu0
      %v2015 = vand.u32 %v1106, 4294901760
      %v2016 = vsub.f32 %v1106, %v2015
      %2017 = vmatprep.mubr.f32.mxu0 %v2016
      %v2018 = vand.u32 %v1105, 4294901760
      %v2019 = vsub.f32 %v1105, %v2018
      %2020 = vmatmul.mubr.f32.gmra.mrb[0].mxu0 %v2019
      %v2021 = vpop.f32.mrb[0].mxu0
      %v2022 = vadd.f32 %v1771, %v2021
      %v2023 = vpop.f32.mrb[0].mxu0
      %v2024 = vand.u32 %v1108, 4294901760
      %v2025 = vsub.f32 %v1108, %v2024
      %2026 = vmatprep.mubr.f32.mxu0 %v2025
      %v2027 = vand.u32 %v1107, 4294901760
      %v2028 = vsub.f32 %v1107, %v2027
      %2029 = vmatmul.mubr.f32.gmra.mrb[0].mxu0 %v2028
      %v2030 = vpop.f32.mrb[0].mxu0
      %v2031 = vadd.f32 %v1778, %v2030
      %v2032 = vpop.f32.mrb[0].mxu0
      %v2033 = vand.u32 %v1110, 4294901760
      %v2034 = vsub.f32 %v1110, %v2033
      %2035 = vmatprep.mubr.f32.mxu0 %v2034
      %v2036 = vand.u32 %v1109, 4294901760
      %v2037 = vsub.f32 %v1109, %v2036
      %2038 = vmatmul.mubr.f32.gmra.mrb[0].mxu0 %v2037
      %v2039 = vpop.f32.mrb[0].mxu0
      %v2040 = vadd.f32 %v1785, %v2039
      %v2041 = vpop.f32.mrb[0].mxu0
      %v2042 = vand.u32 %v1112, 4294901760
      %v2043 = vsub.f32 %v1112, %v2042
      %2044 = vmatprep.mubr.f32.mxu0 %v2043
      %v2045 = vand.u32 %v1111, 4294901760
      %v2046 = vsub.f32 %v1111, %v2045
      %2047 = vmatmul.mubr.f32.gmra.mrb[0].mxu0 %v2046
      %v2048 = vpop.f32.mrb[0].mxu0
      %v2049 = vadd.f32 %v1792, %v2048
      %v2050 = vpop.f32.mrb[0].mxu0
      %v2051 = vand.u32 %v1114, 4294901760
      %v2052 = vsub.f32 %v1114, %v2051
      %2053 = vmatprep.mubr.f32.mxu0 %v2052
      %v2054 = vand.u32 %v1113, 4294901760
      %v2055 = vsub.f32 %v1113, %v2054
      %2056 = vmatmul.mubr.f32.gmra.mrb[0].mxu0 %v2055
      %v2057 = vpop.f32.mrb[0].mxu0
      %v2058 = vadd.f32 %v1799, %v2057
      %v2059 = vpop.f32.mrb[0].mxu0
      %v2060 = vand.u32 %v1116, 4294901760
      %v2061 = vsub.f32 %v1116, %v2060
      %2062 = vmatprep.mubr.f32.mxu0 %v2061
      %v2063 = vand.u32 %v1115, 4294901760
      %v2064 = vsub.f32 %v1115, %v2063
      %2065 = vmatmul.mubr.f32.gmra.mrb[0].mxu0 %v2064
      %v2066 = vpop.f32.mrb[0].mxu0
      %v2067 = vadd.f32 %v1806, %v2066
      %v2068 = vpop.f32.mrb[0].mxu0
      %v2069 = vand.u32 %v1118, 4294901760
      %v2070 = vsub.f32 %v1118, %v2069
      %2071 = vmatprep.mubr.f32.mxu0 %v2070
      %v2072 = vand.u32 %v1117, 4294901760
      %v2073 = vsub.f32 %v1117, %v2072
      %2074 = vmatmul.mubr.f32.gmra.mrb[0].mxu0 %v2073
      %v2075 = vpop.f32.mrb[0].mxu0
      %v2076 = vadd.f32 %v1813, %v2075
      %v2077 = vpop.f32.mrb[0].mxu0
      %v2078 = vand.u32 %v1120, 4294901760
      %v2079 = vsub.f32 %v1120, %v2078
      %2080 = vmatprep.mubr.f32.mxu0 %v2079
      %v2081 = vand.u32 %v1119, 4294901760
      %v2082 = vsub.f32 %v1119, %v2081
      %2083 = vmatmul.mubr.f32.gmra.mrb[0].mxu0 %v2082
      %v2084 = vpop.f32.mrb[0].mxu0
      %v2085 = vadd.f32 %v1820, %v2084
      %v2086 = vpop.f32.mrb[0].mxu0
      %v2087 = vand.u32 %v1122, 4294901760
      %v2088 = vsub.f32 %v1122, %v2087
      %2089 = vmatprep.mubr.f32.mxu0 %v2088
      %v2090 = vand.u32 %v1121, 4294901760
      %v2091 = vsub.f32 %v1121, %v2090
      %2092 = vmatmul.mubr.f32.gmra.mrb[0].mxu0 %v2091
      %v2093 = vpop.f32.mrb[0].mxu0
      %v2094 = vadd.f32 %v1827, %v2093
      %v2095 = vpop.f32.mrb[0].mxu0
      %v2096 = vand.u32 %v1124, 4294901760
      %v2097 = vsub.f32 %v1124, %v2096
      %2098 = vmatprep.mubr.f32.mxu0 %v2097
      %v2099 = vand.u32 %v1123, 4294901760
      %v2100 = vsub.f32 %v1123, %v2099
      %2101 = vmatmul.mubr.f32.gmra.mrb[0].mxu0 %v2100
      %v2102 = vpop.f32.mrb[0].mxu0
      %v2103 = vadd.f32 %v1834, %v2102
      %v2104 = vpop.f32.mrb[0].mxu0
      %v2105 = vand.u32 %v1126, 4294901760
      %v2106 = vsub.f32 %v1126, %v2105
      %2107 = vmatprep.mubr.f32.mxu0 %v2106
      %v2108 = vand.u32 %v1125, 4294901760
      %v2109 = vsub.f32 %v1125, %v2108
      %2110 = vmatmul.mubr.f32.gmra.mrb[0].mxu0 %v2109
      %v2111 = vpop.f32.mrb[0].mxu0
      %v2112 = vadd.f32 %v1841, %v2111
      %v2113 = vpop.f32.mrb[0].mxu0
      %v2114 = vand.u32 %v1128, 4294901760
      %v2115 = vsub.f32 %v1128, %v2114
      %2116 = vmatprep.mubr.f32.mxu0 %v2115
      %v2117 = vand.u32 %v1127, 4294901760
      %v2118 = vsub.f32 %v1127, %v2117
      %2119 = vmatmul.mubr.f32.gmra.mrb[0].mxu0 %v2118
      %v2120 = vpop.f32.mrb[0].mxu0
      %v2121 = vadd.f32 %v1848, %v2120
      %v2122 = vpop.f32.mrb[0].mxu0
      %2123 = vdwg.mxu0
      %2124 = vmatprep.subr.mxu0 0.0
      %v2125 = vand.u32 %v1129, 4294901760
      %2126 = vmatpush1.msra.mxu0 %v2125
      %2127 = vmatprep.subr.mxu0 0.0
      %v2128 = vand.u32 %v1130, 4294901760
      %2129 = vmatpush1.msra.mxu0 %v2128
      %2130 = vmatprep.subr.mxu0 0.0
      %v2131 = vand.u32 %v1131, 4294901760
      %2132 = vmatpush1.msra.mxu0 %v2131
      %2133 = vmatprep.subr.mxu0 0.0
      %v2134 = vand.u32 %v1132, 4294901760
      %2135 = vmatpush1.msra.mxu0 %v2134
      %2136 = vmatprep.subr.mxu0 0.0
      %v2137 = vand.u32 %v1133, 4294901760
      %2138 = vmatpush1.msra.mxu0 %v2137
      %2139 = vmatprep.subr.mxu0 0.0
      %v2140 = vand.u32 %v1134, 4294901760
      %2141 = vmatpush1.msra.mxu0 %v2140
      %2142 = vmatprep.subr.mxu0 0.0
      %v2143 = vand.u32 %v1135, 4294901760
      %2144 = vmatpush1.msra.mxu0 %v2143
      %2145 = vmatprep.subr.mxu0 0.0
      %v2146 = vand.u32 %v1136, 4294901760
      %2147 = vmatpush1.msra.mxu0 %v2146
      %2148 = vmatprep.subr.mxu0 0.0
      %v2149 = vand.u32 %v1137, 4294901760
      %2150 = vmatpush1.msra.mxu0 %v2149
      %2151 = vmatprep.subr.mxu0 0.0
      %v2152 = vand.u32 %v1138, 4294901760
      %2153 = vmatpush1.msra.mxu0 %v2152
      %2154 = vmatprep.subr.mxu0 0.0
      %v2155 = vand.u32 %v1139, 4294901760
      %2156 = vmatpush1.msra.mxu0 %v2155
      %2157 = vmatprep.subr.mxu0 0.0
      %v2158 = vand.u32 %v1140, 4294901760
      %2159 = vmatpush1.msra.mxu0 %v2158
      %2160 = vmatprep.subr.mxu0 0.0
      %v2161 = vand.u32 %v1141, 4294901760
      %2162 = vmatpush1.msra.mxu0 %v2161
      %2163 = vmatprep.subr.mxu0 0.0
      %v2164 = vand.u32 %v1142, 4294901760
      %2165 = vmatpush1.msra.mxu0 %v2164
      %2166 = vmatprep.subr.mxu0 0.0
      %v2167 = vand.u32 %v1143, 4294901760
      %2168 = vmatpush1.msra.mxu0 %v2167
      %2169 = vmatprep.subr.mxu0 0.0
      %v2170 = vand.u32 %v1144, 4294901760
      %2171 = vmatpush1.msra.mxu0 %v2170
      %2172 = vmatprep.subr.mxu0 0.0
      %v2173 = vand.u32 %v1145, 4294901760
      %2174 = vmatpush1.msra.mxu0 %v2173
      %2175 = vmatprep.subr.mxu0 0.0
      %v2176 = vand.u32 %v1146, 4294901760
      %2177 = vmatpush1.msra.mxu0 %v2176
      %2178 = vmatprep.subr.mxu0 0.0
      %v2179 = vand.u32 %v1147, 4294901760
      %2180 = vmatpush1.msra.mxu0 %v2179
      %2181 = vmatprep.subr.mxu0 0.0
      %v2182 = vand.u32 %v1148, 4294901760
      %2183 = vmatpush1.msra.mxu0 %v2182
      %2184 = vmatprep.subr.mxu0 0.0
      %v2185 = vand.u32 %v1149, 4294901760
      %2186 = vmatpush1.msra.mxu0 %v2185
      %2187 = vmatprep.subr.mxu0 0.0
      %v2188 = vand.u32 %v1150, 4294901760
      %2189 = vmatpush1.msra.mxu0 %v2188
      %2190 = vmatprep.subr.mxu0 0.0
      %v2191 = vand.u32 %v1151, 4294901760
      %2192 = vmatpush1.msra.mxu0 %v2191
      %2193 = vmatprep.subr.mxu0 0.0
      %v2194 = vand.u32 %v1152, 4294901760
      %2195 = vmatpush1.msra.mxu0 %v2194
      %2196 = vmatprep.subr.mxu0 0.0
      %v2197 = vand.u32 %v1153, 4294901760
      %2198 = vmatpush1.msra.mxu0 %v2197
      %2199 = vmatprep.subr.mxu0 0.0
      %v2200 = vand.u32 %v1154, 4294901760
      %2201 = vmatpush1.msra.mxu0 %v2200
      %2202 = vmatprep.subr.mxu0 0.0
      %v2203 = vand.u32 %v1155, 4294901760
      %2204 = vmatpush1.msra.mxu0 %v2203
      %2205 = vmatprep.subr.mxu0 0.0
      %v2206 = vand.u32 %v1156, 4294901760
      %2207 = vmatpush1.msra.mxu0 %v2206
      %2208 = vmatprep.subr.mxu0 0.0
      %v2209 = vand.u32 %v1157, 4294901760
      %2210 = vmatpush1.msra.mxu0 %v2209
      %2211 = vmatprep.subr.mxu0 0.0
      %v2212 = vand.u32 %v1158, 4294901760
      %2213 = vmatpush1.msra.mxu0 %v2212
      %2214 = vmatprep.subr.mxu0 0.0
      %v2215 = vand.u32 %v1159, 4294901760
      %2216 = vmatpush1.msra.mxu0 %v2215
      %2217 = vmatprep.subr.mxu0 0.0
      %v2218 = vand.u32 %v1160, 4294901760
      %2219 = vmatpush1.msra.mxu0 %v2218
      %v2220 = vand.u32 %v1098, 4294901760
      %v2221 = vsub.f32 %v1098, %v2220
      %v2222 = vand.u32 %v2221, 4294901760
      %2223 = vmatprep.mubr.f32.mxu0 %v2222
      %v2224 = vand.u32 %v1097, 4294901760
      %v2225 = vsub.f32 %v1097, %v2224
      %v2226 = vand.u32 %v2225, 4294901760
      %2227 = vmatmul.mubr.f32.gmra.mrb[0].mxu0 %v2226
      %v2228 = vpop.f32.mrb[0].mxu0
      %v2229 = vadd.f32 %v1986, %v2228
      %v2230 = vpop.f32.mrb[0].mxu0
      %v2231 = vand.u32 %v1100, 4294901760
      %v2232 = vsub.f32 %v1100, %v2231
      %v2233 = vand.u32 %v2232, 4294901760
      %2234 = vmatprep.mubr.f32.mxu0 %v2233
      %v2235 = vand.u32 %v1099, 4294901760
      %v2236 = vsub.f32 %v1099, %v2235
      %v2237 = vand.u32 %v2236, 4294901760
      %2238 = vmatmul.mubr.f32.gmra.mrb[0].mxu0 %v2237
      %v2239 = vpop.f32.mrb[0].mxu0
      %v2240 = vadd.f32 %v1995, %v2239
      %v2241 = vpop.f32.mrb[0].mxu0
      %v2242 = vand.u32 %v1102, 4294901760
      %v2243 = vsub.f32 %v1102, %v2242
      %v2244 = vand.u32 %v2243, 4294901760
      %2245 = vmatprep.mubr.f32.mxu0 %v2244
      %v2246 = vand.u32 %v1101, 4294901760
      %v2247 = vsub.f32 %v1101, %v2246
      %v2248 = vand.u32 %v2247, 4294901760
      %2249 = vmatmul.mubr.f32.gmra.mrb[0].mxu0 %v2248
      %v2250 = vpop.f32.mrb[0].mxu0
      %v2251 = vadd.f32 %v2004, %v2250
      %v2252 = vpop.f32.mrb[0].mxu0
      %v2253 = vand.u32 %v1104, 4294901760
      %v2254 = vsub.f32 %v1104, %v2253
      %v2255 = vand.u32 %v2254, 4294901760
      %2256 = vmatprep.mubr.f32.mxu0 %v2255
      %v2257 = vand.u32 %v1103, 4294901760
      %v2258 = vsub.f32 %v1103, %v2257
      %v2259 = vand.u32 %v2258, 4294901760
      %2260 = vmatmul.mubr.f32.gmra.mrb[0].mxu0 %v2259
      %v2261 = vpop.f32.mrb[0].mxu0
      %v2262 = vadd.f32 %v2013, %v2261
      %v2263 = vpop.f32.mrb[0].mxu0
      %v2264 = vand.u32 %v1106, 4294901760
      %v2265 = vsub.f32 %v1106, %v2264
      %v2266 = vand.u32 %v2265, 4294901760
      %2267 = vmatprep.mubr.f32.mxu0 %v2266
      %v2268 = vand.u32 %v1105, 4294901760
      %v2269 = vsub.f32 %v1105, %v2268
      %v2270 = vand.u32 %v2269, 4294901760
      %2271 = vmatmul.mubr.f32.gmra.mrb[0].mxu0 %v2270
      %v2272 = vpop.f32.mrb[0].mxu0
      %v2273 = vadd.f32 %v2022, %v2272
      %v2274 = vpop.f32.mrb[0].mxu0
      %v2275 = vand.u32 %v1108, 4294901760
      %v2276 = vsub.f32 %v1108, %v2275
      %v2277 = vand.u32 %v2276, 4294901760
      %2278 = vmatprep.mubr.f32.mxu0 %v2277
      %v2279 = vand.u32 %v1107, 4294901760
      %v2280 = vsub.f32 %v1107, %v2279
      %v2281 = vand.u32 %v2280, 4294901760
      %2282 = vmatmul.mubr.f32.gmra.mrb[0].mxu0 %v2281
      %v2283 = vpop.f32.mrb[0].mxu0
      %v2284 = vadd.f32 %v2031, %v2283
      %v2285 = vpop.f32.mrb[0].mxu0
      %v2286 = vand.u32 %v1110, 4294901760
      %v2287 = vsub.f32 %v1110, %v2286
      %v2288 = vand.u32 %v2287, 4294901760
      %2289 = vmatprep.mubr.f32.mxu0 %v2288
      %v2290 = vand.u32 %v1109, 4294901760
      %v2291 = vsub.f32 %v1109, %v2290
      %v2292 = vand.u32 %v2291, 4294901760
      %2293 = vmatmul.mubr.f32.gmra.mrb[0].mxu0 %v2292
      %v2294 = vpop.f32.mrb[0].mxu0
      %v2295 = vadd.f32 %v2040, %v2294
      %v2296 = vpop.f32.mrb[0].mxu0
      %v2297 = vand.u32 %v1112, 4294901760
      %v2298 = vsub.f32 %v1112, %v2297
      %v2299 = vand.u32 %v2298, 4294901760
      %2300 = vmatprep.mubr.f32.mxu0 %v2299
      %v2301 = vand.u32 %v1111, 4294901760
      %v2302 = vsub.f32 %v1111, %v2301
      %v2303 = vand.u32 %v2302, 4294901760
      %2304 = vmatmul.mubr.f32.gmra.mrb[0].mxu0 %v2303
      %v2305 = vpop.f32.mrb[0].mxu0
      %v2306 = vadd.f32 %v2049, %v2305
      %v2307 = vpop.f32.mrb[0].mxu0
      %v2308 = vand.u32 %v1114, 4294901760
      %v2309 = vsub.f32 %v1114, %v2308
      %v2310 = vand.u32 %v2309, 4294901760
      %2311 = vmatprep.mubr.f32.mxu0 %v2310
      %v2312 = vand.u32 %v1113, 4294901760
      %v2313 = vsub.f32 %v1113, %v2312
      %v2314 = vand.u32 %v2313, 4294901760
      %2315 = vmatmul.mubr.f32.gmra.mrb[0].mxu0 %v2314
      %v2316 = vpop.f32.mrb[0].mxu0
      %v2317 = vadd.f32 %v2058, %v2316
      %v2318 = vpop.f32.mrb[0].mxu0
      %v2319 = vand.u32 %v1116, 4294901760
      %v2320 = vsub.f32 %v1116, %v2319
      %v2321 = vand.u32 %v2320, 4294901760
      %2322 = vmatprep.mubr.f32.mxu0 %v2321
      %v2323 = vand.u32 %v1115, 4294901760
      %v2324 = vsub.f32 %v1115, %v2323
      %v2325 = vand.u32 %v2324, 4294901760
      %2326 = vmatmul.mubr.f32.gmra.mrb[0].mxu0 %v2325
      %v2327 = vpop.f32.mrb[0].mxu0
      %v2328 = vadd.f32 %v2067, %v2327
      %v2329 = vpop.f32.mrb[0].mxu0
      %v2330 = vand.u32 %v1118, 4294901760
      %v2331 = vsub.f32 %v1118, %v2330
      %v2332 = vand.u32 %v2331, 4294901760
      %2333 = vmatprep.mubr.f32.mxu0 %v2332
      %v2334 = vand.u32 %v1117, 4294901760
      %v2335 = vsub.f32 %v1117, %v2334
      %v2336 = vand.u32 %v2335, 4294901760
      %2337 = vmatmul.mubr.f32.gmra.mrb[0].mxu0 %v2336
      %v2338 = vpop.f32.mrb[0].mxu0
      %v2339 = vadd.f32 %v2076, %v2338
      %v2340 = vpop.f32.mrb[0].mxu0
      %v2341 = vand.u32 %v1120, 4294901760
      %v2342 = vsub.f32 %v1120, %v2341
      %v2343 = vand.u32 %v2342, 4294901760
      %2344 = vmatprep.mubr.f32.mxu0 %v2343
      %v2345 = vand.u32 %v1119, 4294901760
      %v2346 = vsub.f32 %v1119, %v2345
      %v2347 = vand.u32 %v2346, 4294901760
      %2348 = vmatmul.mubr.f32.gmra.mrb[0].mxu0 %v2347
      %v2349 = vpop.f32.mrb[0].mxu0
      %v2350 = vadd.f32 %v2085, %v2349
      %v2351 = vpop.f32.mrb[0].mxu0
      %v2352 = vand.u32 %v1122, 4294901760
      %v2353 = vsub.f32 %v1122, %v2352
      %v2354 = vand.u32 %v2353, 4294901760
      %2355 = vmatprep.mubr.f32.mxu0 %v2354
      %v2356 = vand.u32 %v1121, 4294901760
      %v2357 = vsub.f32 %v1121, %v2356
      %v2358 = vand.u32 %v2357, 4294901760
      %2359 = vmatmul.mubr.f32.gmra.mrb[0].mxu0 %v2358
      %v2360 = vpop.f32.mrb[0].mxu0
      %v2361 = vadd.f32 %v2094, %v2360
      %v2362 = vpop.f32.mrb[0].mxu0
      %v2363 = vand.u32 %v1124, 4294901760
      %v2364 = vsub.f32 %v1124, %v2363
      %v2365 = vand.u32 %v2364, 4294901760
      %2366 = vmatprep.mubr.f32.mxu0 %v2365
      %v2367 = vand.u32 %v1123, 4294901760
      %v2368 = vsub.f32 %v1123, %v2367
      %v2369 = vand.u32 %v2368, 4294901760
      %2370 = vmatmul.mubr.f32.gmra.mrb[0].mxu0 %v2369
      %v2371 = vpop.f32.mrb[0].mxu0
      %v2372 = vadd.f32 %v2103, %v2371
      %v2373 = vpop.f32.mrb[0].mxu0
      %v2374 = vand.u32 %v1126, 4294901760
      %v2375 = vsub.f32 %v1126, %v2374
      %v2376 = vand.u32 %v2375, 4294901760
      %2377 = vmatprep.mubr.f32.mxu0 %v2376
      %v2378 = vand.u32 %v1125, 4294901760
      %v2379 = vsub.f32 %v1125, %v2378
      %v2380 = vand.u32 %v2379, 4294901760
      %2381 = vmatmul.mubr.f32.gmra.mrb[0].mxu0 %v2380
      %v2382 = vpop.f32.mrb[0].mxu0
      %v2383 = vadd.f32 %v2112, %v2382
      %v2384 = vpop.f32.mrb[0].mxu0
      %v2385 = vand.u32 %v1128, 4294901760
      %v2386 = vsub.f32 %v1128, %v2385
      %v2387 = vand.u32 %v2386, 4294901760
      %2388 = vmatprep.mubr.f32.mxu0 %v2387
      %v2389 = vand.u32 %v1127, 4294901760
      %v2390 = vsub.f32 %v1127, %v2389
      %v2391 = vand.u32 %v2390, 4294901760
      %2392 = vmatmul.mubr.f32.gmra.mrb[0].mxu0 %v2391
      %v2393 = vpop.f32.mrb[0].mxu0
      %v2394 = vadd.f32 %v2121, %v2393
      %v2395 = vpop.f32.mrb[0].mxu0
      %2396 = vdwg.mxu0
      %2397 = vmatprep.subr.mxu0 0.0
      %v2398 = vand.u32 %v1129, 4294901760
      %v2399 = vsub.f32 %v1129, %v2398
      %v2400 = vand.u32 %v2399, 4294901760
      %2401 = vmatpush1.msra.mxu0 %v2400
      %2402 = vmatprep.subr.mxu0 0.0
      %v2403 = vand.u32 %v1130, 4294901760
      %v2404 = vsub.f32 %v1130, %v2403
      %v2405 = vand.u32 %v2404, 4294901760
      %2406 = vmatpush1.msra.mxu0 %v2405
      %2407 = vmatprep.subr.mxu0 0.0
      %v2408 = vand.u32 %v1131, 4294901760
      %v2409 = vsub.f32 %v1131, %v2408
      %v2410 = vand.u32 %v2409, 4294901760
      %2411 = vmatpush1.msra.mxu0 %v2410
      %2412 = vmatprep.subr.mxu0 0.0
      %v2413 = vand.u32 %v1132, 4294901760
      %v2414 = vsub.f32 %v1132, %v2413
      %v2415 = vand.u32 %v2414, 4294901760
      %2416 = vmatpush1.msra.mxu0 %v2415
      %2417 = vmatprep.subr.mxu0 0.0
      %v2418 = vand.u32 %v1133, 4294901760
      %v2419 = vsub.f32 %v1133, %v2418
      %v2420 = vand.u32 %v2419, 4294901760
      %2421 = vmatpush1.msra.mxu0 %v2420
      %2422 = vmatprep.subr.mxu0 0.0
      %v2423 = vand.u32 %v1134, 4294901760
      %v2424 = vsub.f32 %v1134, %v2423
      %v2425 = vand.u32 %v2424, 4294901760
      %2426 = vmatpush1.msra.mxu0 %v2425
      %2427 = vmatprep.subr.mxu0 0.0
      %v2428 = vand.u32 %v1135, 4294901760
      %v2429 = vsub.f32 %v1135, %v2428
      %v2430 = vand.u32 %v2429, 4294901760
      %2431 = vmatpush1.msra.mxu0 %v2430
      %2432 = vmatprep.subr.mxu0 0.0
      %v2433 = vand.u32 %v1136, 4294901760
      %v2434 = vsub.f32 %v1136, %v2433
      %v2435 = vand.u32 %v2434, 4294901760
      %2436 = vmatpush1.msra.mxu0 %v2435
      %2437 = vmatprep.subr.mxu0 0.0
      %v2438 = vand.u32 %v1137, 4294901760
      %v2439 = vsub.f32 %v1137, %v2438
      %v2440 = vand.u32 %v2439, 4294901760
      %2441 = vmatpush1.msra.mxu0 %v2440
      %2442 = vmatprep.subr.mxu0 0.0
      %v2443 = vand.u32 %v1138, 4294901760
      %v2444 = vsub.f32 %v1138, %v2443
      %v2445 = vand.u32 %v2444, 4294901760
      %2446 = vmatpush1.msra.mxu0 %v2445
      %2447 = vmatprep.subr.mxu0 0.0
      %v2448 = vand.u32 %v1139, 4294901760
      %v2449 = vsub.f32 %v1139, %v2448
      %v2450 = vand.u32 %v2449, 4294901760
      %2451 = vmatpush1.msra.mxu0 %v2450
      %2452 = vmatprep.subr.mxu0 0.0
      %v2453 = vand.u32 %v1140, 4294901760
      %v2454 = vsub.f32 %v1140, %v2453
      %v2455 = vand.u32 %v2454, 4294901760
      %2456 = vmatpush1.msra.mxu0 %v2455
      %2457 = vmatprep.subr.mxu0 0.0
      %v2458 = vand.u32 %v1141, 4294901760
      %v2459 = vsub.f32 %v1141, %v2458
      %v2460 = vand.u32 %v2459, 4294901760
      %2461 = vmatpush1.msra.mxu0 %v2460
      %2462 = vmatprep.subr.mxu0 0.0
      %v2463 = vand.u32 %v1142, 4294901760
      %v2464 = vsub.f32 %v1142, %v2463
      %v2465 = vand.u32 %v2464, 4294901760
      %2466 = vmatpush1.msra.mxu0 %v2465
      %2467 = vmatprep.subr.mxu0 0.0
      %v2468 = vand.u32 %v1143, 4294901760
      %v2469 = vsub.f32 %v1143, %v2468
      %v2470 = vand.u32 %v2469, 4294901760
      %2471 = vmatpush1.msra.mxu0 %v2470
      %2472 = vmatprep.subr.mxu0 0.0
      %v2473 = vand.u32 %v1144, 4294901760
      %v2474 = vsub.f32 %v1144, %v2473
      %v2475 = vand.u32 %v2474, 4294901760
      %2476 = vmatpush1.msra.mxu0 %v2475
      %2477 = vmatprep.subr.mxu0 0.0
      %v2478 = vand.u32 %v1145, 4294901760
      %v2479 = vsub.f32 %v1145, %v2478
      %v2480 = vand.u32 %v2479, 4294901760
      %2481 = vmatpush1.msra.mxu0 %v2480
      %2482 = vmatprep.subr.mxu0 0.0
      %v2483 = vand.u32 %v1146, 4294901760
      %v2484 = vsub.f32 %v1146, %v2483
      %v2485 = vand.u32 %v2484, 4294901760
      %2486 = vmatpush1.msra.mxu0 %v2485
      %2487 = vmatprep.subr.mxu0 0.0
      %v2488 = vand.u32 %v1147, 4294901760
      %v2489 = vsub.f32 %v1147, %v2488
      %v2490 = vand.u32 %v2489, 4294901760
      %2491 = vmatpush1.msra.mxu0 %v2490
      %2492 = vmatprep.subr.mxu0 0.0
      %v2493 = vand.u32 %v1148, 4294901760
      %v2494 = vsub.f32 %v1148, %v2493
      %v2495 = vand.u32 %v2494, 4294901760
      %2496 = vmatpush1.msra.mxu0 %v2495
      %2497 = vmatprep.subr.mxu0 0.0
      %v2498 = vand.u32 %v1149, 4294901760
      %v2499 = vsub.f32 %v1149, %v2498
      %v2500 = vand.u32 %v2499, 4294901760
      %2501 = vmatpush1.msra.mxu0 %v2500
      %2502 = vmatprep.subr.mxu0 0.0
      %v2503 = vand.u32 %v1150, 4294901760
      %v2504 = vsub.f32 %v1150, %v2503
      %v2505 = vand.u32 %v2504, 4294901760
      %2506 = vmatpush1.msra.mxu0 %v2505
      %2507 = vmatprep.subr.mxu0 0.0
      %v2508 = vand.u32 %v1151, 4294901760
      %v2509 = vsub.f32 %v1151, %v2508
      %v2510 = vand.u32 %v2509, 4294901760
      %2511 = vmatpush1.msra.mxu0 %v2510
      %2512 = vmatprep.subr.mxu0 0.0
      %v2513 = vand.u32 %v1152, 4294901760
      %v2514 = vsub.f32 %v1152, %v2513
      %v2515 = vand.u32 %v2514, 4294901760
      %2516 = vmatpush1.msra.mxu0 %v2515
      %2517 = vmatprep.subr.mxu0 0.0
      %v2518 = vand.u32 %v1153, 4294901760
      %v2519 = vsub.f32 %v1153, %v2518
      %v2520 = vand.u32 %v2519, 4294901760
      %2521 = vmatpush1.msra.mxu0 %v2520
      %2522 = vmatprep.subr.mxu0 0.0
      %v2523 = vand.u32 %v1154, 4294901760
      %v2524 = vsub.f32 %v1154, %v2523
      %v2525 = vand.u32 %v2524, 4294901760
      %2526 = vmatpush1.msra.mxu0 %v2525
      %2527 = vmatprep.subr.mxu0 0.0
      %v2528 = vand.u32 %v1155, 4294901760
      %v2529 = vsub.f32 %v1155, %v2528
      %v2530 = vand.u32 %v2529, 4294901760
      %2531 = vmatpush1.msra.mxu0 %v2530
      %2532 = vmatprep.subr.mxu0 0.0
      %v2533 = vand.u32 %v1156, 4294901760
      %v2534 = vsub.f32 %v1156, %v2533
      %v2535 = vand.u32 %v2534, 4294901760
      %2536 = vmatpush1.msra.mxu0 %v2535
      %2537 = vmatprep.subr.mxu0 0.0
      %v2538 = vand.u32 %v1157, 4294901760
      %v2539 = vsub.f32 %v1157, %v2538
      %v2540 = vand.u32 %v2539, 4294901760
      %2541 = vmatpush1.msra.mxu0 %v2540
      %2542 = vmatprep.subr.mxu0 0.0
      %v2543 = vand.u32 %v1158, 4294901760
      %v2544 = vsub.f32 %v1158, %v2543
      %v2545 = vand.u32 %v2544, 4294901760
      %2546 = vmatpush1.msra.mxu0 %v2545
      %2547 = vmatprep.subr.mxu0 0.0
      %v2548 = vand.u32 %v1159, 4294901760
      %v2549 = vsub.f32 %v1159, %v2548
      %v2550 = vand.u32 %v2549, 4294901760
      %2551 = vmatpush1.msra.mxu0 %v2550
      %2552 = vmatprep.subr.mxu0 0.0
      %v2553 = vand.u32 %v1160, 4294901760
      %v2554 = vsub.f32 %v1160, %v2553
      %v2555 = vand.u32 %v2554, 4294901760
      %2556 = vmatpush1.msra.mxu0 %v2555
      %v2557 = vand.u32 %v1098, 4294901760
      %2558 = vmatprep.mubr.f32.mxu0 %v2557
      %v2559 = vand.u32 %v1097, 4294901760
      %2560 = vmatmul.mubr.f32.gmra.mrb[0].mxu0 %v2559
      %v2561 = vpop.f32.mrb[0].mxu0
      %v2562 = vadd.f32 %v2229, %v2561
      %v2563 = vpop.f32.mrb[0].mxu0
      %v2564 = vand.u32 %v1100, 4294901760
      %2565 = vmatprep.mubr.f32.mxu0 %v2564
      %v2566 = vand.u32 %v1099, 4294901760
      %2567 = vmatmul.mubr.f32.gmra.mrb[0].mxu0 %v2566
      %v2568 = vpop.f32.mrb[0].mxu0
      %v2569 = vadd.f32 %v2240, %v2568
      %v2570 = vpop.f32.mrb[0].mxu0
      %v2571 = vand.u32 %v1102, 4294901760
      %2572 = vmatprep.mubr.f32.mxu0 %v2571
      %v2573 = vand.u32 %v1101, 4294901760
      %2574 = vmatmul.mubr.f32.gmra.mrb[0].mxu0 %v2573
      %v2575 = vpop.f32.mrb[0].mxu0
      %v2576 = vadd.f32 %v2251, %v2575
      %v2577 = vpop.f32.mrb[0].mxu0
      %v2578 = vand.u32 %v1104, 4294901760
      %2579 = vmatprep.mubr.f32.mxu0 %v2578
      %v2580 = vand.u32 %v1103, 4294901760
      %2581 = vmatmul.mubr.f32.gmra.mrb[0].mxu0 %v2580
      %v2582 = vpop.f32.mrb[0].mxu0
      %v2583 = vadd.f32 %v2262, %v2582
      %v2584 = vpop.f32.mrb[0].mxu0
      %v2585 = vand.u32 %v1106, 4294901760
      %2586 = vmatprep.mubr.f32.mxu0 %v2585
      %v2587 = vand.u32 %v1105, 4294901760
      %2588 = vmatmul.mubr.f32.gmra.mrb[0].mxu0 %v2587
      %v2589 = vpop.f32.mrb[0].mxu0
      %v2590 = vadd.f32 %v2273, %v2589
      %v2591 = vpop.f32.mrb[0].mxu0
      %v2592 = vand.u32 %v1108, 4294901760
      %2593 = vmatprep.mubr.f32.mxu0 %v2592
      %v2594 = vand.u32 %v1107, 4294901760
      %2595 = vmatmul.mubr.f32.gmra.mrb[0].mxu0 %v2594
      %v2596 = vpop.f32.mrb[0].mxu0
      %v2597 = vadd.f32 %v2284, %v2596
      %v2598 = vpop.f32.mrb[0].mxu0
      %v2599 = vand.u32 %v1110, 4294901760
      %2600 = vmatprep.mubr.f32.mxu0 %v2599
      %v2601 = vand.u32 %v1109, 4294901760
      %2602 = vmatmul.mubr.f32.gmra.mrb[0].mxu0 %v2601
      %v2603 = vpop.f32.mrb[0].mxu0
      %v2604 = vadd.f32 %v2295, %v2603
      %v2605 = vpop.f32.mrb[0].mxu0
      %v2606 = vand.u32 %v1112, 4294901760
      %2607 = vmatprep.mubr.f32.mxu0 %v2606
      %v2608 = vand.u32 %v1111, 4294901760
      %2609 = vmatmul.mubr.f32.gmra.mrb[0].mxu0 %v2608
      %v2610 = vpop.f32.mrb[0].mxu0
      %v2611 = vadd.f32 %v2306, %v2610
      %v2612 = vpop.f32.mrb[0].mxu0
      %v2613 = vand.u32 %v1114, 4294901760
      %2614 = vmatprep.mubr.f32.mxu0 %v2613
      %v2615 = vand.u32 %v1113, 4294901760
      %2616 = vmatmul.mubr.f32.gmra.mrb[0].mxu0 %v2615
      %v2617 = vpop.f32.mrb[0].mxu0
      %v2618 = vadd.f32 %v2317, %v2617
      %v2619 = vpop.f32.mrb[0].mxu0
      %v2620 = vand.u32 %v1116, 4294901760
      %2621 = vmatprep.mubr.f32.mxu0 %v2620
      %v2622 = vand.u32 %v1115, 4294901760
      %2623 = vmatmul.mubr.f32.gmra.mrb[0].mxu0 %v2622
      %v2624 = vpop.f32.mrb[0].mxu0
      %v2625 = vadd.f32 %v2328, %v2624
      %v2626 = vpop.f32.mrb[0].mxu0
      %v2627 = vand.u32 %v1118, 4294901760
      %2628 = vmatprep.mubr.f32.mxu0 %v2627
      %v2629 = vand.u32 %v1117, 4294901760
      %2630 = vmatmul.mubr.f32.gmra.mrb[0].mxu0 %v2629
      %v2631 = vpop.f32.mrb[0].mxu0
      %v2632 = vadd.f32 %v2339, %v2631
      %v2633 = vpop.f32.mrb[0].mxu0
      %v2634 = vand.u32 %v1120, 4294901760
      %2635 = vmatprep.mubr.f32.mxu0 %v2634
      %v2636 = vand.u32 %v1119, 4294901760
      %2637 = vmatmul.mubr.f32.gmra.mrb[0].mxu0 %v2636
      %v2638 = vpop.f32.mrb[0].mxu0
      %v2639 = vadd.f32 %v2350, %v2638
      %v2640 = vpop.f32.mrb[0].mxu0
      %v2641 = vand.u32 %v1122, 4294901760
      %2642 = vmatprep.mubr.f32.mxu0 %v2641
      %v2643 = vand.u32 %v1121, 4294901760
      %2644 = vmatmul.mubr.f32.gmra.mrb[0].mxu0 %v2643
      %v2645 = vpop.f32.mrb[0].mxu0
      %v2646 = vadd.f32 %v2361, %v2645
      %v2647 = vpop.f32.mrb[0].mxu0
      %v2648 = vand.u32 %v1124, 4294901760
      %2649 = vmatprep.mubr.f32.mxu0 %v2648
      %v2650 = vand.u32 %v1123, 4294901760
      %2651 = vmatmul.mubr.f32.gmra.mrb[0].mxu0 %v2650
      %v2652 = vpop.f32.mrb[0].mxu0
      %v2653 = vadd.f32 %v2372, %v2652
      %v2654 = vpop.f32.mrb[0].mxu0
      %v2655 = vand.u32 %v1126, 4294901760
      %2656 = vmatprep.mubr.f32.mxu0 %v2655
      %v2657 = vand.u32 %v1125, 4294901760
      %2658 = vmatmul.mubr.f32.gmra.mrb[0].mxu0 %v2657
      %v2659 = vpop.f32.mrb[0].mxu0
      %v2660 = vadd.f32 %v2383, %v2659
      %v2661 = vpop.f32.mrb[0].mxu0
      %v2662 = vand.u32 %v1128, 4294901760
      %2663 = vmatprep.mubr.f32.mxu0 %v2662
      %v2664 = vand.u32 %v1127, 4294901760
      %2665 = vmatmul.mubr.f32.gmra.mrb[0].mxu0 %v2664
      %v2666 = vpop.f32.mrb[0].mxu0
      %v2667 = vadd.f32 %v2394, %v2666
      %v2668 = vpop.f32.mrb[0].mxu0
      %2669 = vdwg.mxu0
      %2670 = vmatprep.subr.mxu0 0.0
      %v2671 = vand.u32 %v1129, 4294901760
      %2672 = vmatpush1.msra.mxu0 %v2671
      %2673 = vmatprep.subr.mxu0 0.0
      %v2674 = vand.u32 %v1130, 4294901760
      %2675 = vmatpush1.msra.mxu0 %v2674
      %2676 = vmatprep.subr.mxu0 0.0
      %v2677 = vand.u32 %v1131, 4294901760
      %2678 = vmatpush1.msra.mxu0 %v2677
      %2679 = vmatprep.subr.mxu0 0.0
      %v2680 = vand.u32 %v1132, 4294901760
      %2681 = vmatpush1.msra.mxu0 %v2680
      %2682 = vmatprep.subr.mxu0 0.0
      %v2683 = vand.u32 %v1133, 4294901760
      %2684 = vmatpush1.msra.mxu0 %v2683
      %2685 = vmatprep.subr.mxu0 0.0
      %v2686 = vand.u32 %v1134, 4294901760
      %2687 = vmatpush1.msra.mxu0 %v2686
      %2688 = vmatprep.subr.mxu0 0.0
      %v2689 = vand.u32 %v1135, 4294901760
      %2690 = vmatpush1.msra.mxu0 %v2689
      %2691 = vmatprep.subr.mxu0 0.0
      %v2692 = vand.u32 %v1136, 4294901760
      %2693 = vmatpush1.msra.mxu0 %v2692
      %2694 = vmatprep.subr.mxu0 0.0
      %v2695 = vand.u32 %v1137, 4294901760
      %2696 = vmatpush1.msra.mxu0 %v2695
      %2697 = vmatprep.subr.mxu0 0.0
      %v2698 = vand.u32 %v1138, 4294901760
      %2699 = vmatpush1.msra.mxu0 %v2698
      %2700 = vmatprep.subr.mxu0 0.0
      %v2701 = vand.u32 %v1139, 4294901760
      %2702 = vmatpush1.msra.mxu0 %v2701
      %2703 = vmatprep.subr.mxu0 0.0
      %v2704 = vand.u32 %v1140, 4294901760
      %2705 = vmatpush1.msra.mxu0 %v2704
      %2706 = vmatprep.subr.mxu0 0.0
      %v2707 = vand.u32 %v1141, 4294901760
      %2708 = vmatpush1.msra.mxu0 %v2707
      %2709 = vmatprep.subr.mxu0 0.0
      %v2710 = vand.u32 %v1142, 4294901760
      %2711 = vmatpush1.msra.mxu0 %v2710
      %2712 = vmatprep.subr.mxu0 0.0
      %v2713 = vand.u32 %v1143, 4294901760
      %2714 = vmatpush1.msra.mxu0 %v2713
      %2715 = vmatprep.subr.mxu0 0.0
      %v2716 = vand.u32 %v1144, 4294901760
      %2717 = vmatpush1.msra.mxu0 %v2716
      %2718 = vmatprep.subr.mxu0 0.0
      %v2719 = vand.u32 %v1145, 4294901760
      %2720 = vmatpush1.msra.mxu0 %v2719
      %2721 = vmatprep.subr.mxu0 0.0
      %v2722 = vand.u32 %v1146, 4294901760
      %2723 = vmatpush1.msra.mxu0 %v2722
      %2724 = vmatprep.subr.mxu0 0.0
      %v2725 = vand.u32 %v1147, 4294901760
      %2726 = vmatpush1.msra.mxu0 %v2725
      %2727 = vmatprep.subr.mxu0 0.0
      %v2728 = vand.u32 %v1148, 4294901760
      %2729 = vmatpush1.msra.mxu0 %v2728
      %2730 = vmatprep.subr.mxu0 0.0
      %v2731 = vand.u32 %v1149, 4294901760
      %2732 = vmatpush1.msra.mxu0 %v2731
      %2733 = vmatprep.subr.mxu0 0.0
      %v2734 = vand.u32 %v1150, 4294901760
      %2735 = vmatpush1.msra.mxu0 %v2734
      %2736 = vmatprep.subr.mxu0 0.0
      %v2737 = vand.u32 %v1151, 4294901760
      %2738 = vmatpush1.msra.mxu0 %v2737
      %2739 = vmatprep.subr.mxu0 0.0
      %v2740 = vand.u32 %v1152, 4294901760
      %2741 = vmatpush1.msra.mxu0 %v2740
      %2742 = vmatprep.subr.mxu0 0.0
      %v2743 = vand.u32 %v1153, 4294901760
      %2744 = vmatpush1.msra.mxu0 %v2743
      %2745 = vmatprep.subr.mxu0 0.0
      %v2746 = vand.u32 %v1154, 4294901760
      %2747 = vmatpush1.msra.mxu0 %v2746
      %2748 = vmatprep.subr.mxu0 0.0
      %v2749 = vand.u32 %v1155, 4294901760
      %2750 = vmatpush1.msra.mxu0 %v2749
      %2751 = vmatprep.subr.mxu0 0.0
      %v2752 = vand.u32 %v1156, 4294901760
      %2753 = vmatpush1.msra.mxu0 %v2752
      %2754 = vmatprep.subr.mxu0 0.0
      %v2755 = vand.u32 %v1157, 4294901760
      %2756 = vmatpush1.msra.mxu0 %v2755
      %2757 = vmatprep.subr.mxu0 0.0
      %v2758 = vand.u32 %v1158, 4294901760
      %2759 = vmatpush1.msra.mxu0 %v2758
      %2760 = vmatprep.subr.mxu0 0.0
      %v2761 = vand.u32 %v1159, 4294901760
      %2762 = vmatpush1.msra.mxu0 %v2761
      %2763 = vmatprep.subr.mxu0 0.0
      %v2764 = vand.u32 %v1160, 4294901760
      %2765 = vmatpush1.msra.mxu0 %v2764
      %v2766 = vand.u32 %v1098, 4294901760
      %2767 = vmatprep.mubr.f32.mxu0 %v2766
      %v2768 = vand.u32 %v1097, 4294901760
      %2769 = vmatmul.mubr.f32.gmra.mrb[0].mxu0 %v2768
      %v2770 = vpop.f32.mrb[0].mxu0
      %v2771 = vadd.f32 %v2562, %v2770
      %v2772 = vpop.f32.mrb[0].mxu0
      %v2773 = vand.u32 %v1100, 4294901760
      %2774 = vmatprep.mubr.f32.mxu0 %v2773
      %v2775 = vand.u32 %v1099, 4294901760
      %2776 = vmatmul.mubr.f32.gmra.mrb[0].mxu0 %v2775
      %v2777 = vpop.f32.mrb[0].mxu0
      %v2778 = vadd.f32 %v2569, %v2777
      %v2779 = vpop.f32.mrb[0].mxu0
      %v2780 = vand.u32 %v1102, 4294901760
      %2781 = vmatprep.mubr.f32.mxu0 %v2780
      %v2782 = vand.u32 %v1101, 4294901760
      %2783 = vmatmul.mubr.f32.gmra.mrb[0].mxu0 %v2782
      %v2784 = vpop.f32.mrb[0].mxu0
      %v2785 = vadd.f32 %v2576, %v2784
      %v2786 = vpop.f32.mrb[0].mxu0
      %v2787 = vand.u32 %v1104, 4294901760
      %2788 = vmatprep.mubr.f32.mxu0 %v2787
      %v2789 = vand.u32 %v1103, 4294901760
      %2790 = vmatmul.mubr.f32.gmra.mrb[0].mxu0 %v2789
      %v2791 = vpop.f32.mrb[0].mxu0
      %v2792 = vadd.f32 %v2583, %v2791
      %v2793 = vpop.f32.mrb[0].mxu0
      %v2794 = vand.u32 %v1106, 4294901760
      %2795 = vmatprep.mubr.f32.mxu0 %v2794
      %v2796 = vand.u32 %v1105, 4294901760
      %2797 = vmatmul.mubr.f32.gmra.mrb[0].mxu0 %v2796
      %v2798 = vpop.f32.mrb[0].mxu0
      %v2799 = vadd.f32 %v2590, %v2798
      %v2800 = vpop.f32.mrb[0].mxu0
      %v2801 = vand.u32 %v1108, 4294901760
      %2802 = vmatprep.mubr.f32.mxu0 %v2801
      %v2803 = vand.u32 %v1107, 4294901760
      %2804 = vmatmul.mubr.f32.gmra.mrb[0].mxu0 %v2803
      %v2805 = vpop.f32.mrb[0].mxu0
      %v2806 = vadd.f32 %v2597, %v2805
      %v2807 = vpop.f32.mrb[0].mxu0
      %v2808 = vand.u32 %v1110, 4294901760
      %2809 = vmatprep.mubr.f32.mxu0 %v2808
      %v2810 = vand.u32 %v1109, 4294901760
      %2811 = vmatmul.mubr.f32.gmra.mrb[0].mxu0 %v2810
      %v2812 = vpop.f32.mrb[0].mxu0
      %v2813 = vadd.f32 %v2604, %v2812
      %v2814 = vpop.f32.mrb[0].mxu0
      %v2815 = vand.u32 %v1112, 4294901760
      %2816 = vmatprep.mubr.f32.mxu0 %v2815
      %v2817 = vand.u32 %v1111, 4294901760
      %2818 = vmatmul.mubr.f32.gmra.mrb[0].mxu0 %v2817
      %v2819 = vpop.f32.mrb[0].mxu0
      %v2820 = vadd.f32 %v2611, %v2819
      %v2821 = vpop.f32.mrb[0].mxu0
      %v2822 = vand.u32 %v1114, 4294901760
      %2823 = vmatprep.mubr.f32.mxu0 %v2822
      %v2824 = vand.u32 %v1113, 4294901760
      %2825 = vmatmul.mubr.f32.gmra.mrb[0].mxu0 %v2824
      %v2826 = vpop.f32.mrb[0].mxu0
      %v2827 = vadd.f32 %v2618, %v2826
      %v2828 = vpop.f32.mrb[0].mxu0
      %v2829 = vand.u32 %v1116, 4294901760
      %2830 = vmatprep.mubr.f32.mxu0 %v2829
      %v2831 = vand.u32 %v1115, 4294901760
      %2832 = vmatmul.mubr.f32.gmra.mrb[0].mxu0 %v2831
      %v2833 = vpop.f32.mrb[0].mxu0
      %v2834 = vadd.f32 %v2625, %v2833
      %v2835 = vpop.f32.mrb[0].mxu0
      %v2836 = vand.u32 %v1118, 4294901760
      %2837 = vmatprep.mubr.f32.mxu0 %v2836
      %v2838 = vand.u32 %v1117, 4294901760
      %2839 = vmatmul.mubr.f32.gmra.mrb[0].mxu0 %v2838
      %v2840 = vpop.f32.mrb[0].mxu0
      %v2841 = vadd.f32 %v2632, %v2840
      %v2842 = vpop.f32.mrb[0].mxu0
      %v2843 = vand.u32 %v1120, 4294901760
      %2844 = vmatprep.mubr.f32.mxu0 %v2843
      %v2845 = vand.u32 %v1119, 4294901760
      %2846 = vmatmul.mubr.f32.gmra.mrb[0].mxu0 %v2845
      %v2847 = vpop.f32.mrb[0].mxu0
      %v2848 = vadd.f32 %v2639, %v2847
      %v2849 = vpop.f32.mrb[0].mxu0
      %v2850 = vand.u32 %v1122, 4294901760
      %2851 = vmatprep.mubr.f32.mxu0 %v2850
      %v2852 = vand.u32 %v1121, 4294901760
      %2853 = vmatmul.mubr.f32.gmra.mrb[0].mxu0 %v2852
      %v2854 = vpop.f32.mrb[0].mxu0
      %v2855 = vadd.f32 %v2646, %v2854
      %v2856 = vpop.f32.mrb[0].mxu0
      %v2857 = vand.u32 %v1124, 4294901760
      %2858 = vmatprep.mubr.f32.mxu0 %v2857
      %v2859 = vand.u32 %v1123, 4294901760
      %2860 = vmatmul.mubr.f32.gmra.mrb[0].mxu0 %v2859
      %v2861 = vpop.f32.mrb[0].mxu0
      %v2862 = vadd.f32 %v2653, %v2861
      %v2863 = vpop.f32.mrb[0].mxu0
      %v2864 = vand.u32 %v1126, 4294901760
      %2865 = vmatprep.mubr.f32.mxu0 %v2864
      %v2866 = vand.u32 %v1125, 4294901760
      %2867 = vmatmul.mubr.f32.gmra.mrb[0].mxu0 %v2866
      %v2868 = vpop.f32.mrb[0].mxu0
      %v2869 = vadd.f32 %v2660, %v2868
      %v2870 = vpop.f32.mrb[0].mxu0
      %v2871 = vand.u32 %v1128, 4294901760
      %2872 = vmatprep.mubr.f32.mxu0 %v2871
      %v2873 = vand.u32 %v1127, 4294901760
      %2874 = vmatmul.mubr.f32.gmra.mrb[0].mxu0 %v2873
      %v2875 = vpop.f32.mrb[0].mxu0
      %v2876 = vadd.f32 %v2667, %v2875
      %v2877 = vpop.f32.mrb[0].mxu0
      %2878 = vdwg.mxu0
      %v2879 = vadd.f32 %v1161, %v2771
      %v2880 = vadd.f32 %v1162, %v2778
      %v2881 = vadd.f32 %v1163, %v2785
      %v2882 = vadd.f32 %v1164, %v2792
      %v2883 = vadd.f32 %v1165, %v2799
      %v2884 = vadd.f32 %v1166, %v2806
      %v2885 = vadd.f32 %v1167, %v2813
      %v2886 = vadd.f32 %v1168, %v2820
      %v2887 = vadd.f32 %v1169, %v2827
      %v2888 = vadd.f32 %v1170, %v2834
      %v2889 = vadd.f32 %v1171, %v2841
      %v2890 = vadd.f32 %v1172, %v2848
      %v2891 = vadd.f32 %v1173, %v2855
      %v2892 = vadd.f32 %v1174, %v2862
      %v2893 = vadd.f32 %v1175, %v2869
      %v2894 = vadd.f32 %v1176, %v2876
      %vm2895 = vcmask 261120
      %2896 = vst.msk [vmem:[#allocation2] sm:$0xff] %vm2895, %v2879
      %2897 = vst.msk [vmem:[#allocation2 + $0x8] sm:$0xff] %vm2895, %v2880
      %2898 = vst.msk [vmem:[#allocation2 + $0x10] sm:$0xff] %vm2895, %v2881
      %2899 = vst.msk [vmem:[#allocation2 + $0x18] sm:$0xff] %vm2895, %v2882
      %2900 = vst.msk [vmem:[#allocation2 + $0x20] sm:$0xff] %vm2895, %v2883
      %2901 = vst.msk [vmem:[#allocation2 + $0x28] sm:$0xff] %vm2895, %v2884
      %2902 = vst.msk [vmem:[#allocation2 + $0x30] sm:$0xff] %vm2895, %v2885
      %2903 = vst.msk [vmem:[#allocation2 + $0x38] sm:$0xff] %vm2895, %v2886
      %2904 = vst.msk [vmem:[#allocation2 + $0x40] sm:$0xff] %vm2895, %v2887
      %2905 = vst.msk [vmem:[#allocation2 + $0x48] sm:$0xff] %vm2895, %v2888
      %2906 = vst.msk [vmem:[#allocation2 + $0x50] sm:$0xff] %vm2895, %v2889
      %2907 = vst.msk [vmem:[#allocation2 + $0x58] sm:$0xff] %vm2895, %v2890
      %2908 = vst.msk [vmem:[#allocation2 + $0x60] sm:$0xff] %vm2895, %v2891
      %2909 = vst.msk [vmem:[#allocation2 + $0x68] sm:$0xff] %vm2895, %v2892
      %2910 = vst.msk [vmem:[#allocation2 + $0x70] sm:$0xff] %vm2895, %v2893
      %2911 = vst.msk [vmem:[#allocation2 + $0x78] sm:$0xff] %vm2895, %v2894
      // Predicated region
      $region37: #{feature_sample.1} parent=31 // pred_check
        %p2912 = pneg %p251
      $region38: #{feature_sample.1} parent=31 // pred_check_branch
        %2914 = sbr.rel (%p2912) target = $region40
      $region39: #{feature_sample.1} parent=31 // pred_region
        %v2915 = vld [vmem:[#allocation2] sm:$0xff]
        %v2916 = vld [vmem:[#allocation2 + $0x8] sm:$0xff]
        %v2917 = vld [vmem:[#allocation2 + $0x10] sm:$0xff]
        %v2918 = vld [vmem:[#allocation2 + $0x18] sm:$0xff]
        %v2919 = vld [vmem:[#allocation2 + $0x20] sm:$0xff]
        %v2920 = vld [vmem:[#allocation2 + $0x28] sm:$0xff]
        %v2921 = vld [vmem:[#allocation2 + $0x30] sm:$0xff]
        %v2922 = vld [vmem:[#allocation2 + $0x38] sm:$0xff]
        %v2923 = vld [vmem:[#allocation2 + $0x40] sm:$0xff]
        %v2924 = vld [vmem:[#allocation2 + $0x48] sm:$0xff]
        %v2925 = vld [vmem:[#allocation2 + $0x50] sm:$0xff]
        %v2926 = vld [vmem:[#allocation2 + $0x58] sm:$0xff]
        %v2927 = vld [vmem:[#allocation2 + $0x60] sm:$0xff]
        %v2928 = vld [vmem:[#allocation2 + $0x68] sm:$0xff]
        %v2929 = vld [vmem:[#allocation2 + $0x70] sm:$0xff]
        %v2930 = vld [vmem:[#allocation2 + $0x78] sm:$0xff]
        %2931 = vst.msk [vmem:[%s249] sm:$0xff] %vm2895, %v2915
        %2932 = vst.msk [vmem:[%s249 + $0x8] sm:$0xff] %vm2895, %v2916
        %2933 = vst.msk [vmem:[%s249 + $0x10] sm:$0xff] %vm2895, %v2917
        %2934 = vst.msk [vmem:[%s249 + $0x18] sm:$0xff] %vm2895, %v2918
        %2935 = vst.msk [vmem:[%s249 + $0x20] sm:$0xff] %vm2895, %v2919
        %2936 = vst.msk [vmem:[%s249 + $0x28] sm:$0xff] %vm2895, %v2920
        %2937 = vst.msk [vmem:[%s249 + $0x30] sm:$0xff] %vm2895, %v2921
        %2938 = vst.msk [vmem:[%s249 + $0x38] sm:$0xff] %vm2895, %v2922
        %2939 = vst.msk [vmem:[%s249 + $0x40] sm:$0xff] %vm2895, %v2923
        %2940 = vst.msk [vmem:[%s249 + $0x48] sm:$0xff] %vm2895, %v2924
        %2941 = vst.msk [vmem:[%s249 + $0x50] sm:$0xff] %vm2895, %v2925
        %2942 = vst.msk [vmem:[%s249 + $0x58] sm:$0xff] %vm2895, %v2926
        %2943 = vst.msk [vmem:[%s249 + $0x60] sm:$0xff] %vm2895, %v2927
        %2944 = vst.msk [vmem:[%s249 + $0x68] sm:$0xff] %vm2895, %v2928
        %2945 = vst.msk [vmem:[%s249 + $0x70] sm:$0xff] %vm2895, %v2929
        %2946 = vst.msk [vmem:[%s249 + $0x78] sm:$0xff] %vm2895, %v2930
      $region40: #{feature_sample.1} parent=31 // pred_fallthru
        _
      %s2947 = smul.u32 16, %s25
      %p2948 = scmp.lt.s32.totalorder %s2947, 31
      %s2949 = scalar_select %p2948, %s2947, 31
      %s2950 = smul.addr %s2949, 8
      %s2951 = scalar_lea.vmem %s4, %s2950
      // Predicated region
      $region41: #{feature_sample.1} parent=31 // pred_check
        %p2952 = pneg %p133
      $region42: #{feature_sample.1} parent=31 // pred_check_branch
        %2954 = sbr.rel (%p2952) target = $region44
      $region43: #{feature_sample.1} parent=31 // pred_region
        %s2955 = smul.u32 16, %s25
      $region44: #{feature_sample.1} parent=31 // pred_fallthru
        _
    $region32: #{feature_sample.1} parent=5 // pred_fallthru
      _
    %p2956 = scmp.le.s32.totalorder 2, %s16
    // Predicated region
    $region45: #{feature_sample.1} parent=5 // pred_check
      %p2957 = pneg %p2956
    $region46: #{feature_sample.1} parent=5 // pred_check_branch
      %2959 = sbr.rel (%p2957) target = $region48
    $region47: #{feature_sample.1} parent=5 // pred_region
      %s2960 = ssub.s32 %s16, 2
      // Predicated region
      $region49: #{feature_sample.1} parent=47 // pred_check
        %p2961 = pneg %p139
      $region50: #{feature_sample.1} parent=47 // pred_check_branch
        %2963 = sbr.rel (%p2961) target = $region52
      $region51: #{feature_sample.1} parent=47 // pred_region
        %s2964 = smul.u32 16, %s27
        %p2965 = scmp.lt.s32.totalorder %s2964, 31
        %s2966 = scalar_select %p2965, %s2964, 31
        %s2967 = smul.addr %s2966, 8
        %s2968 = scalar_lea.vmem %s4, %s2967
      $region52: #{feature_sample.1} parent=47 // pred_fallthru
        _
    $region48: #{feature_sample.1} parent=5 // pred_fallthru
      _
  $region6: #{feature_sample.1} parent=0 // loop_footer
    %s20 = sadd.s32 1, %s16
  $region7: #{feature_sample.1} parent=0 // loop_footer_branch
    %15 = sbr.rel target = $region3
  $region8: #{feature_sample.1} parent=0 // loop_exit
    _

</llo_original>
